<compile_context>
chip_gen: v6e
topology: v6e:2x2x1
jax: 0.10.0
libtpu: 0.0.40
codegen_flags: <defaults>
</compile_context>

<pallas_src>
import functools

import jax
import jax.numpy as jnp
from jax import lax
from jax.experimental import pallas as pl
from jax.experimental.pallas import tpu as pltpu


def _round_up(x, m):
    return ((x + m - 1) // m) * m


def _default_vmem_limit():
    # ~64 MiB scoped VMEM on v5e/v6e (128 MiB physical), ~48 MiB on v7x (64 MiB).
    try:
        cap = int(getattr(pltpu.get_tpu_info(), "vmem_capacity_bytes", 128 << 20))
    except Exception:
        cap = 64 << 20
    return min(64 << 20, (cap * 3) // 4)


_VMEM_LIMIT = _default_vmem_limit()


# ---------------- fused dense: (LN?) -> matmul -> bias(+GELU)(+res) ----------

def _dense_kernel(*refs, activation, nk, has_ln, has_res, ln_eps):
    idx = 0
    a_ref = refs[idx]; idx += 1
    w_ref = refs[idx]; idx += 1
    b_ref = refs[idx]; idx += 1
    if has_ln:
        g_ref = refs[idx]; idx += 1
        bln_ref = refs[idx]; idx += 1
    if has_res:
        r_ref = refs[idx]; idx += 1
    o_ref = refs[idx]; idx += 1
    acc_ref = refs[idx] if nk > 1 else None

    a = a_ref[...]
    if has_ln:
        # Fused LayerNorm prologue, statistics in f32 (requires tk == K).
        af = a.astype(jnp.float32)
        mu = jnp.mean(af, axis=-1, keepdims=True)
        var = jnp.mean((af - mu) ** 2, axis=-1, keepdims=True)
        af = (af - mu) * lax.rsqrt(var + ln_eps)
        af = af * g_ref[...] + bln_ref[...]
        a = af.astype(jnp.bfloat16)

    part = jnp.dot(a, w_ref[...], preferred_element_type=jnp.float32)

    def epilogue(acc):
        y = acc + b_ref[...]                     # fused bias, f32 epilogue
        if activation == "gelu":                 # fused GELU (static choice)
            y = jax.nn.gelu(y)
        if has_res:                              # fused residual add
            y = y + r_ref[...].astype(jnp.float32)
        o_ref[...] = y.astype(o_ref.dtype)       # bf16 residual stream out

    if nk == 1:
        # Single k-tile: no accumulator scratch, single store path.
        epilogue(part)
    else:
        k = pl.program_id(2)

        @pl.when(k == 0)
        def _():
            acc_ref[...] = jnp.zeros_like(acc_ref)

        acc_ref[...] += part

        @pl.when(k == nk - 1)
        def _():
            epilogue(acc_ref[...])


def pallas_dense(x, w, b, *, activation=None, ln=None, residual=None,
                 out_dtype=jnp.bfloat16, tm_max=512, tn_max=512, tk_max=512):
    """y = act(LN?(x) @ w + b) (+ residual), bf16 MXU operands / f32 accumulation.

    x: [..., K] (cast to bf16); w: [K, N] bf16 pre-cast at init; b: [1, N] f32.
    ln=(gamma, beta) [1, K] f32 fuses LayerNorm into the prologue (needs K to
    fit one k-tile).  residual: [..., N] fused into the f32 epilogue.
    """
    lead = x.shape[:-1]
    K = x.shape[-1]
    N = w.shape[1]
    a = x.reshape(-1, K).astype(jnp.bfloat16)
    M = a.shape[0]

    has_ln = ln is not None
    if has_ln and K > tk_max:
        # TODO(synk): fuse LN across k-tiles; fall back to XLA for huge K.
        a = layer_norm(a, ln[0], ln[1])
        has_ln = False
    has_res = residual is not None

    # ---- tile selection: feature dims are NOT padded when they fit one tile.
    if K <= tk_max:
        tk, Kp = K, K
    else:
        tk = tk_max
        Kp = _round_up(K, tk)
    nk = Kp // tk

    if N <= tn_max:
        tn, Np = N, N
    else:
        Np = _round_up(N, 128)
        tn = next(t for t in (tn_max, 256, 128) if Np % t == 0)
    nn_ = Np // tn

    if M <= tm_max:
        tm = _round_up(M, 16)          # bf16 packs 16 rows per sublane group
        Mp = tm
    else:
        tm = tm_max
        Mp = _round_up(M, tm)
    nm = Mp // tm

    # v7x has 2 TensorCores sharding the "parallel" axes: ensure >= 2 parallel
    # tiles whenever splitting N is legal.
    if nm * nn_ == 1 and tn >= 256 and tn % 256 == 0:
        tn //= 2
        nn_ = Np // tn

    # ---- padding (M only at these sizes; K/N only when actually tiled).
    if Mp != M or Kp != K:
        a = jnp.pad(a, ((0, Mp - M), (0, Kp - K)))
    if Kp != K or Np != N:
        w = jnp.pad(w, ((0, Kp - K), (0, Np - N)))
    if Np != N:
        b = jnp.pad(b, ((0, 0), (0, Np - N)))

    in_specs = [pl.BlockSpec((tm, tk), lambda i, j, k: (i, k)),
                pl.BlockSpec((tk, tn), lambda i, j, k: (k, j)),
                pl.BlockSpec((1, tn), lambda i, j, k: (0, j))]
    args = [a, w, b]
    if has_ln:
        in_specs += [pl.BlockSpec((1, K), lambda i, j, k: (0, 0)),
                     pl.BlockSpec((1, K), lambda i, j, k: (0, 0))]
        args += [ln[0], ln[1]]
    if has_res:
        r = residual.reshape(-1, N)
        if Mp != M or Np != N:
            r = jnp.pad(r, ((0, Mp - M), (0, Np - N)))
        in_specs.append(pl.BlockSpec((tm, tn), lambda i, j, k: (i, j)))
        args.append(r)

    out = pl.pallas_call(
        functools.partial(_dense_kernel, activation=activation, nk=nk,
                          has_ln=has_ln, has_res=has_res, ln_eps=1e-6),
        grid=(nm, nn_, nk),
        in_specs=in_specs,
        out_specs=pl.BlockSpec((tm, tn), lambda i, j, k: (i, j)),
        out_shape=jax.ShapeDtypeStruct((Mp, Np), out_dtype),
        scratch_shapes=([pltpu.VMEM((tm, tn), jnp.float32)] if nk > 1 else []),
        compiler_params=pltpu.CompilerParams(
            dimension_semantics=("parallel", "parallel", "arbitrary"),
            vmem_limit_bytes=_VMEM_LIMIT),
    )(*args)

    if Mp != M or Np != N:
        out = out[:M, :N]
    return out.reshape(*lead, N)


# ------------------- fused probe head (pool + BN + Linear) ------------------

def _probe_head_kernel(feats_ref, gamma_ref, beta_ref, w_ref, b_ref,
                       out_ref, sum_ref, *, inv_n_tokens):
    t = pl.program_id(0)

    @pl.when(t == 0)
    def _():
        sum_ref[...] = jnp.zeros_like(sum_ref)

    # Token-sum over this tile: bf16 stream, f32 accumulation.
    sum_ref[...] += jnp.sum(feats_ref[...].astype(jnp.float32), axis=1)

    @pl.when(t == pl.num_programs(0) - 1)
    def _():
        # x.transpose(-1,-2); AdaptiveAvgPool1d(1); squeeze(-1) == token mean.
        pooled = sum_ref[...] * inv_n_tokens                       # [B, F] f32
        # BatchNorm1d, training-mode batch statistics over the FULL batch (f32).
        mu = jnp.mean(pooled, axis=0, keepdims=True)               # [1, F]
        var = jnp.mean((pooled - mu) ** 2, axis=0, keepdims=True)  # [1, F]
        xhat = (pooled - mu) * lax.rsqrt(var + 1e-5)
        y = xhat * gamma_ref[...] + beta_ref[...]                  # [B, F]
        # Linear probe on the MXU (num_classes lane-padded to 128 at init).
        out_ref[...] = (jnp.dot(y.astype(jnp.bfloat16), w_ref[...],
                                preferred_element_type=jnp.float32)
                        + b_ref[...])


def probe_head(feats, gamma, beta, w, b, num_classes, max_tile_bytes=None):
    B, N, F = feats.shape
    Cp = w.shape[1]
    feats = feats.astype(jnp.bfloat16)      # no-op: residual stream is bf16
    if max_tile_bytes is None:
        max_tile_bytes = _VMEM_LIMIT // 8   # headroom for double-buffer + weight

    # Token tile from the byte budget alone (multiple of 8, no artificial cap).
    bytes_per_token = B * F * feats.dtype.itemsize
    tN = max(8, (max_tile_bytes // max(bytes_per_token, 1)) // 8 * 8)
    tN = min(tN, _round_up(N, 8))
    Np_tok = _round_up(N, tN)
    if Np_tok != N:
        feats = jnp.pad(feats, ((0, 0), (0, Np_tok - N), (0, 0)))  # zero rows: safe for the sum

    # TODO(synk): at real sizes mark the grid-invariant w/gamma/beta/b specs
    # pipeline_mode=pl.Buffered(1) so the multi-MiB probe weight is not
    # double-buffered inside v7x's smaller scoped VMEM.
    out = pl.pallas_call(
        functools.partial(_probe_head_kernel, inv_n_tokens=1.0 / N),
        grid=(Np_tok // tN,),
        in_specs=[pl.BlockSpec((B, tN, F), lambda t: (0, t, 0)),
                  pl.BlockSpec((1, F), lambda t: (0, 0)),
                  pl.BlockSpec((1, F), lambda t: (0, 0)),
                  pl.BlockSpec((F, Cp), lambda t: (0, 0)),
                  pl.BlockSpec((1, Cp), lambda t: (0, 0))],
        out_specs=pl.BlockSpec((B, Cp), lambda t: (0, 0)),
        out_shape=jax.ShapeDtypeStruct((B, Cp), jnp.float32),
        scratch_shapes=[pltpu.VMEM((B, F), jnp.float32)],
        compiler_params=pltpu.CompilerParams(
            dimension_semantics=("arbitrary",),    # token axis is a reduction
            vmem_limit_bytes=_VMEM_LIMIT),
    )(feats, gamma, beta, w, b)

    return out[:, :num_classes]


# ------------------------ target encoder (stand-in) ------------------------

def layer_norm(x, g, b, eps=1e-6):
    xf = x.astype(jnp.float32)
    mu = jnp.mean(xf, axis=-1, keepdims=True)
    var = jnp.mean((xf - mu) ** 2, axis=-1, keepdims=True)
    return ((xf - mu) * lax.rsqrt(var + eps) * g + b).astype(x.dtype)


def vit_encoder(x, params, patch_size, num_heads):
    # x: [B, C, H, W]  (NCHW, as in PyTorch).
    B, C, H, W = x.shape
    p = patch_size
    nh, nw = H // p, W // p
    # Patch embed == Conv2d(C, E, kernel=p, stride=p): unfold -> fused dense.
    patches = x.reshape(B, C, nh, p, nw, p).transpose(0, 2, 4, 1, 3, 5)
    patches = patches.reshape(B, nh * nw, C * p * p).astype(jnp.bfloat16)
    tok = pallas_dense(patches, params["patch_w"], params["patch_b"])   # [B, N, E] bf16
    tok = tok + params["pos_embed"]                                      # tiny bf16 add

    E = tok.shape[-1]
    hd = E // num_heads
    layer_outs = []
    for blk in params["blocks"]:
        # Attention: LayerNorm fused into the qkv matmul prologue.
        qkv = pallas_dense(tok, blk["qkv_w"], blk["qkv_b"],
                           ln=(blk["ln1_g"], blk["ln1_b"]))              # [B, N, 3E]
        q, k, v = jnp.split(qkv, 3, axis=-1)

        def heads(t):
            return t.reshape(B, -1, num_heads, hd).transpose(0, 2, 1, 3)

        q, k, v = heads(q), heads(k), heads(v)
        # TODO(synk): at real IJEPA sizes replace with a fused flash-attention
        # Pallas kernel (online softmax over q-tile x kv-tile grid); at these
        # toy sizes the [B,H,N,N] scores are a few KiB so XLA handles it.
        attn = jnp.einsum("bhqd,bhkd->bhqk", q, k,
                          preferred_element_type=jnp.float32) * (1.0 / hd ** 0.5)
        attn = jax.nn.softmax(attn, axis=-1).astype(jnp.bfloat16)
        o = jnp.einsum("bhqk,bhkd->bhqd", attn, v)
        o = o.transpose(0, 2, 1, 3).reshape(B, -1, E)
        tok = pallas_dense(o, blk["proj_w"], blk["proj_b"], residual=tok)  # fused +tok

        # MLP: LayerNorm prologue + GELU epilogue fused; residual fused into fc2.
        h = pallas_dense(tok, blk["fc1_w"], blk["fc1_b"],
                         ln=(blk["ln2_g"], blk["ln2_b"]), activation="gelu")
        tok = pallas_dense(h, blk["fc2_w"], blk["fc2_b"], residual=tok)
        layer_outs.append(tok)

    # IJEPA linear probing: concat of last-4-layer tokens -> [B, N, 4*E] bf16.
    feats = jnp.concatenate(layer_outs[-4:], axis=-1)
    final = layer_norm(tok, params["lnf_g"], params["lnf_b"])  # unused by probe (DCE'd under jit)
    return final, feats


# ------------------------------ parameters ---------------------------------

def init_params(key, C, p, E, depth, mlp_ratio, num_patches, num_classes):
    keys = jax.random.split(key, 4 + depth)

    def w(k, shape, scale=0.02):
        # Weights pre-cast to bf16 ONCE at init (MXU-native; no per-call astype).
        return (scale * jax.random.normal(k, shape, jnp.float32)).astype(jnp.bfloat16)

    hidden = mlp_ratio * E
    enc = {
        "patch_w": w(keys[0], (C * p * p, E)),
        "patch_b": jnp.zeros((1, E), jnp.float32),
        "pos_embed": w(keys[1], (1, num_patches, E)),
        "lnf_g": jnp.ones((1, E), jnp.float32),
        "lnf_b": jnp.zeros((1, E), jnp.float32),
        "blocks": [],
    }
    for d in range(depth):
        bk = jax.random.split(keys[4 + d], 4)
        enc["blocks"].append({
            "ln1_g": jnp.ones((1, E), jnp.float32), "ln1_b": jnp.zeros((1, E), jnp.float32),
            "qkv_w": w(bk[0], (E, 3 * E)), "qkv_b": jnp.zeros((1, 3 * E), jnp.float32),
            "proj_w": w(bk[1], (E, E)), "proj_b": jnp.zeros((1, E), jnp.float32),
            "ln2_g": jnp.ones((1, E), jnp.float32), "ln2_b": jnp.zeros((1, E), jnp.float32),
            "fc1_w": w(bk[2], (E, hidden)), "fc1_b": jnp.zeros((1, hidden), jnp.float32),
            "fc2_w": w(bk[3], (hidden, E)), "fc2_b": jnp.zeros((1, E), jnp.float32),
        })

    F = 4 * E
    Cp = _round_up(num_classes, 128)  # lane-dense probe columns, padded ONCE here
    lin_w = 0.02 * jax.random.normal(keys[2], (F, num_classes), jnp.float32)
    probe = {
        "bn_gamma": jnp.ones((1, F), jnp.float32),     # BatchNorm1d defaults
        "bn_beta": jnp.zeros((1, F), jnp.float32),
        "lin_w": jnp.pad(lin_w, ((0, 0), (0, Cp - num_classes))).astype(jnp.bfloat16),
        "lin_b": jnp.zeros((1, Cp), jnp.float32),
    }
    return enc, probe


def ijepa_linear_probe_forward(x, enc_params, probe_params, *,
                               num_classes, patch_size, num_heads):
    _, feats = vit_encoder(x, enc_params, patch_size, num_heads)  # _, x = target_encoder(x)
    return probe_head(feats,
                      probe_params["bn_gamma"], probe_params["bn_beta"],
                      probe_params["lin_w"], probe_params["lin_b"],
                      num_classes)


# --------------------------------- main -------------------------------------

if __name__ == "__main__":
    B, C, crop_size, patch_size = 2, 3, 16, 8
    embed_dim, depth, num_heads, mlp_ratio, num_classes = 32, 4, 4, 4, 10
    num_patches = (crop_size // patch_size) ** 2

    key = jax.random.PRNGKey(0)
    kx, kp = jax.random.split(key)
    x = jax.random.normal(kx, (B, C, crop_size, crop_size), jnp.float32)
    enc_params, probe_params = init_params(
        kp, C, patch_size, embed_dim, depth, mlp_ratio, num_patches, num_classes)

    fwd = jax.jit(functools.partial(ijepa_linear_probe_forward,
                                    num_classes=num_classes,
                                    patch_size=patch_size,
                                    num_heads=num_heads))
    out = fwd(x, enc_params, probe_params)
    out = jax.block_until_ready(out)
    assert out.shape == (B, num_classes) and out.dtype == jnp.float32
    print("KERNEL_OK")
</pallas_src>

<mosaic_0001>
module attributes {stable_mosaic.version = 11 : i64} {
  func.func @_dense_kernel(%arg0: i32, %arg1: i32, %arg2: i32, %arg3: memref<16x192xbf16, #tpu.memory_space<vmem>>, %arg4: memref<192x32xbf16, #tpu.memory_space<vmem>>, %arg5: memref<1x32xf32, #tpu.memory_space<vmem>>, %arg6: memref<16x32xbf16, #tpu.memory_space<vmem>>) attributes {dimension_semantics = [#tpu.dimension_semantics<parallel>, #tpu.dimension_semantics<parallel>, #tpu.dimension_semantics<arbitrary>], iteration_bounds = array<i64: 1, 1, 1>, scalar_prefetch = 0 : i64, scratch_operands = 0 : i64, tpu.core_type = #tpu.core_type<tc>, window_params = [{transform_indices = @transform_0, window_bounds = array<i64: 16, 192>}, {transform_indices = @transform_1, window_bounds = array<i64: 192, 32>}, {transform_indices = @transform_2, window_bounds = array<i64: 1, 32>}, {transform_indices = @transform_3, window_bounds = array<i64: 16, 32>}]} {
    %c0 = arith.constant 0 : index
    %c0_0 = arith.constant 0 : index
    %0 = vector.load %arg3[%c0, %c0_0] : memref<16x192xbf16, #tpu.memory_space<vmem>>, vector<16x192xbf16>
    %c0_1 = arith.constant 0 : index
    %c0_2 = arith.constant 0 : index
    %1 = vector.load %arg4[%c0_1, %c0_2] : memref<192x32xbf16, #tpu.memory_space<vmem>>, vector<192x32xbf16>
    %cst = arith.constant dense<0.000000e+00> : vector<16x32xf32>
    %2 = tpu.matmul %0, %1, %cst {dimension_numbers = #tpu.dot_dimension_numbers<[1], [0], [0], [1], [0, 0, 1, 1], [], []>} : vector<16x192xbf16>, vector<192x32xbf16>, vector<16x32xf32> -> vector<16x32xf32>
    %c0_3 = arith.constant 0 : index
    %c0_4 = arith.constant 0 : index
    %3 = vector.load %arg5[%c0_3, %c0_4] : memref<1x32xf32, #tpu.memory_space<vmem>>, vector<1x32xf32>
    %4 = vector.broadcast %3 : vector<1x32xf32> to vector<16x32xf32>
    %5 = arith.addf %2, %4 : vector<16x32xf32>
    %6 = arith.truncf %5 : vector<16x32xf32> to vector<16x32xbf16>
    %c0_5 = arith.constant 0 : index
    %c0_6 = arith.constant 0 : index
    %7 = vector.load %arg6[%c0_5, %c0_6] : memref<16x32xbf16, #tpu.memory_space<vmem>>, vector<16x32xbf16>
    tpu.vector_store %arg6[%c0_5, %c0_6], %6 {strides = array<i32>} : memref<16x32xbf16, #tpu.memory_space<vmem>>, vector<16x32xbf16>,
    return
  }
  func.func @transform_0(%arg0: i32, %arg1: i32, %arg2: i32) -> (i32, i32) {
    %c0_i32 = arith.constant 0 : i32
    return %arg0, %arg2 : i32, i32
  }
  func.func @transform_1(%arg0: i32, %arg1: i32, %arg2: i32) -> (i32, i32) {
    %c0_i32 = arith.constant 0 : i32
    return %arg2, %arg1 : i32, i32
  }
  func.func @transform_2(%arg0: i32, %arg1: i32, %arg2: i32) -> (i32, i32) {
    %c0_i32 = arith.constant 0 : i32
    %c0_i32_0 = arith.constant 0 : i32
    return %c0_i32, %arg1 : i32, i32
  }
  func.func @transform_3(%arg0: i32, %arg1: i32, %arg2: i32) -> (i32, i32) {
    %c0_i32 = arith.constant 0 : i32
    return %arg0, %arg1 : i32, i32
  }
}

module attributes {stable_mosaic.version = 11 : i64} {
  func.func @_dense_kernel(%arg0: i32, %arg1: i32, %arg2: i32, %arg3: memref<16x32xbf16, #tpu.memory_space<vmem>>, %arg4: memref<32x96xbf16, #tpu.memory_space<vmem>>, %arg5: memref<1x96xf32, #tpu.memory_space<vmem>>, %arg6: memref<1x32xf32, #tpu.memory_space<vmem>>, %arg7: memref<1x32xf32, #tpu.memory_space<vmem>>, %arg8: memref<16x96xbf16, #tpu.memory_space<vmem>>) attributes {dimension_semantics = [#tpu.dimension_semantics<parallel>, #tpu.dimension_semantics<parallel>, #tpu.dimension_semantics<arbitrary>], iteration_bounds = array<i64: 1, 1, 1>, scalar_prefetch = 0 : i64, scratch_operands = 0 : i64, tpu.core_type = #tpu.core_type<tc>, window_params = [{transform_indices = @transform_0, window_bounds = array<i64: 16, 32>}, {transform_indices = @transform_1, window_bounds = array<i64: 32, 96>}, {transform_indices = @transform_2, window_bounds = array<i64: 1, 96>}, {pipeline_mode = #tpu.pipeline_mode<synchronous>, transform_indices = @transform_3, window_bounds = array<i64: 1, 32>}, {pipeline_mode = #tpu.pipeline_mode<synchronous>, transform_indices = @transform_4, window_bounds = array<i64: 1, 32>}, {transform_indices = @transform_5, window_bounds = array<i64: 16, 96>}]} {
    %c0 = arith.constant 0 : index
    %c0_0 = arith.constant 0 : index
    %0 = vector.load %arg3[%c0, %c0_0] : memref<16x32xbf16, #tpu.memory_space<vmem>>, vector<16x32xbf16>
    %1 = arith.extf %0 : vector<16x32xbf16> to vector<16x32xf32>
    %cst = arith.constant dense<0.000000e+00> : vector<16xf32>
    %2 = vector.multi_reduction <add>, %1, %cst [1] : vector<16x32xf32> to vector<16xf32>
    %3 = vector.shape_cast %2 : vector<16xf32> to vector<16x1xf32>
    %cst_1 = arith.constant 3.200000e+01 : f32
    %4 = vector.broadcast %cst_1 : f32 to vector<16x1xf32>
    %5 = arith.divf %3, %4 : vector<16x1xf32>
    %6 = vector.broadcast %5 : vector<16x1xf32> to vector<16x32xf32>
    %7 = arith.subf %1, %6 : vector<16x32xf32>
    %8 = arith.mulf %7, %7 : vector<16x32xf32>
    %cst_2 = arith.constant dense<0.000000e+00> : vector<16xf32>
    %9 = vector.multi_reduction <add>, %8, %cst_2 [1] : vector<16x32xf32> to vector<16xf32>
    %10 = vector.shape_cast %9 : vector<16xf32> to vector<16x1xf32>
    %cst_3 = arith.constant 3.200000e+01 : f32
    %11 = vector.broadcast %cst_3 : f32 to vector<16x1xf32>
    %12 = arith.divf %10, %11 : vector<16x1xf32>
    %13 = vector.broadcast %5 : vector<16x1xf32> to vector<16x32xf32>
    %14 = arith.subf %1, %13 : vector<16x32xf32>
    %cst_4 = arith.constant 9.99999997E-7 : f32
    %15 = vector.broadcast %cst_4 : f32 to vector<16x1xf32>
    %16 = arith.addf %12, %15 : vector<16x1xf32>
    %17 = math.rsqrt %16 : vector<16x1xf32>
    %18 = vector.broadcast %17 : vector<16x1xf32> to vector<16x32xf32>
    %19 = arith.mulf %14, %18 : vector<16x32xf32>
    %c0_5 = arith.constant 0 : index
    %c0_6 = arith.constant 0 : index
    %20 = vector.load %arg6[%c0_5, %c0_6] : memref<1x32xf32, #tpu.memory_space<vmem>>, vector<1x32xf32>
    %21 = vector.broadcast %20 : vector<1x32xf32> to vector<16x32xf32>
    %22 = arith.mulf %19, %21 : vector<16x32xf32>
    %c0_7 = arith.constant 0 : index
    %c0_8 = arith.constant 0 : index
    %23 = vector.load %arg7[%c0_7, %c0_8] : memref<1x32xf32, #tpu.memory_space<vmem>>, vector<1x32xf32>
    %24 = vector.broadcast %23 : vector<1x32xf32> to vector<16x32xf32>
    %25 = arith.addf %22, %24 : vector<16x32xf32>
    %26 = arith.truncf %25 : vector<16x32xf32> to vector<16x32xbf16>
    %c0_9 = arith.constant 0 : index
    %c0_10 = arith.constant 0 : index
    %27 = vector.load %arg4[%c0_9, %c0_10] : memref<32x96xbf16, #tpu.memory_space<vmem>>, vector<32x96xbf16>
    %cst_11 = arith.constant dense<0.000000e+00> : vector<16x96xf32>
    %28 = tpu.matmul %26, %27, %cst_11 {dimension_numbers = #tpu.dot_dimension_numbers<[1], [0], [0], [1], [0, 0, 1, 1], [], []>} : vector<16x32xbf16>, vector<32x96xbf16>, vector<16x96xf32> -> vector<16x96xf32>
    %c0_12 = arith.constant 0 : index
    %c0_13 = arith.constant 0 : index
    %29 = vector.load %arg5[%c0_12, %c0_13] : memref<1x96xf32, #tpu.memory_space<vmem>>, vector<1x96xf32>
    %30 = vector.broadcast %29 : vector<1x96xf32> to vector<16x96xf32>
    %31 = arith.addf %28, %30 : vector<16x96xf32>
    %32 = arith.truncf %31 : vector<16x96xf32> to vector<16x96xbf16>
    %c0_14 = arith.constant 0 : index
    %c0_15 = arith.constant 0 : index
    %33 = vector.load %arg8[%c0_14, %c0_15] : memref<16x96xbf16, #tpu.memory_space<vmem>>, vector<16x96xbf16>
    tpu.vector_store %arg8[%c0_14, %c0_15], %32 {strides = array<i32>} : memref<16x96xbf16, #tpu.memory_space<vmem>>, vector<16x96xbf16>,
    return
  }
  func.func @transform_0(%arg0: i32, %arg1: i32, %arg2: i32) -> (i32, i32) {
    %c0_i32 = arith.constant 0 : i32
    return %arg0, %arg2 : i32, i32
  }
  func.func @transform_1(%arg0: i32, %arg1: i32, %arg2: i32) -> (i32, i32) {
    %c0_i32 = arith.constant 0 : i32
    return %arg2, %arg1 : i32, i32
  }
  func.func @transform_2(%arg0: i32, %arg1: i32, %arg2: i32) -> (i32, i32) {
    %c0_i32 = arith.constant 0 : i32
    %c0_i32_0 = arith.constant 0 : i32
    return %c0_i32, %arg1 : i32, i32
  }
  func.func @transform_3(%arg0: i32, %arg1: i32, %arg2: i32) -> (i32, i32) {
    %c0_i32 = arith.constant 0 : i32
    %c0_i32_0 = arith.constant 0 : i32
    %c0_i32_1 = arith.constant 0 : i32
    return %c0_i32, %c0_i32_0 : i32, i32
  }
  func.func @transform_4(%arg0: i32, %arg1: i32, %arg2: i32) -> (i32, i32) {
    %c0_i32 = arith.constant 0 : i32
    %c0_i32_0 = arith.constant 0 : i32
    %c0_i32_1 = arith.constant 0 : i32
    return %c0_i32, %c0_i32_0 : i32, i32
  }
  func.func @transform_5(%arg0: i32, %arg1: i32, %arg2: i32) -> (i32, i32) {
    %c0_i32 = arith.constant 0 : i32
    return %arg0, %arg1 : i32, i32
  }
}

module attributes {stable_mosaic.version = 11 : i64} {
  func.func @_dense_kernel(%arg0: i32, %arg1: i32, %arg2: i32, %arg3: memref<16x32xbf16, #tpu.memory_space<vmem>>, %arg4: memref<32x32xbf16, #tpu.memory_space<vmem>>, %arg5: memref<1x32xf32, #tpu.memory_space<vmem>>, %arg6: memref<16x32xbf16, #tpu.memory_space<vmem>>, %arg7: memref<16x32xbf16, #tpu.memory_space<vmem>>) attributes {dimension_semantics = [#tpu.dimension_semantics<parallel>, #tpu.dimension_semantics<parallel>, #tpu.dimension_semantics<arbitrary>], iteration_bounds = array<i64: 1, 1, 1>, scalar_prefetch = 0 : i64, scratch_operands = 0 : i64, tpu.core_type = #tpu.core_type<tc>, window_params = [{transform_indices = @transform_0, window_bounds = array<i64: 16, 32>}, {transform_indices = @transform_1, window_bounds = array<i64: 32, 32>}, {transform_indices = @transform_2, window_bounds = array<i64: 1, 32>}, {transform_indices = @transform_3, window_bounds = array<i64: 16, 32>}, {transform_indices = @transform_4, window_bounds = array<i64: 16, 32>}]} {
    %c0 = arith.constant 0 : index
    %c0_0 = arith.constant 0 : index
    %0 = vector.load %arg3[%c0, %c0_0] : memref<16x32xbf16, #tpu.memory_space<vmem>>, vector<16x32xbf16>
    %c0_1 = arith.constant 0 : index
    %c0_2 = arith.constant 0 : index
    %1 = vector.load %arg4[%c0_1, %c0_2] : memref<32x32xbf16, #tpu.memory_space<vmem>>, vector<32x32xbf16>
    %cst = arith.constant dense<0.000000e+00> : vector<16x32xf32>
    %2 = tpu.matmul %0, %1, %cst {dimension_numbers = #tpu.dot_dimension_numbers<[1], [0], [0], [1], [0, 0, 1, 1], [], []>} : vector<16x32xbf16>, vector<32x32xbf16>, vector<16x32xf32> -> vector<16x32xf32>
    %c0_3 = arith.constant 0 : index
    %c0_4 = arith.constant 0 : index
    %3 = vector.load %arg5[%c0_3, %c0_4] : memref<1x32xf32, #tpu.memory_space<vmem>>, vector<1x32xf32>
    %4 = vector.broadcast %3 : vector<1x32xf32> to vector<16x32xf32>
    %5 = arith.addf %2, %4 : vector<16x32xf32>
    %c0_5 = arith.constant 0 : index
    %c0_6 = arith.constant 0 : index
    %6 = vector.load %arg6[%c0_5, %c0_6] : memref<16x32xbf16, #tpu.memory_space<vmem>>, vector<16x32xbf16>
    %7 = arith.extf %6 : vector<16x32xbf16> to vector<16x32xf32>
    %8 = arith.addf %5, %7 : vector<16x32xf32>
    %9 = arith.truncf %8 : vector<16x32xf32> to vector<16x32xbf16>
    %c0_7 = arith.constant 0 : index
    %c0_8 = arith.constant 0 : index
    %10 = vector.load %arg7[%c0_7, %c0_8] : memref<16x32xbf16, #tpu.memory_space<vmem>>, vector<16x32xbf16>
    tpu.vector_store %arg7[%c0_7, %c0_8], %9 {strides = array<i32>} : memref<16x32xbf16, #tpu.memory_space<vmem>>, vector<16x32xbf16>,
    return
  }
  func.func @transform_0(%arg0: i32, %arg1: i32, %arg2: i32) -> (i32, i32) {
    %c0_i32 = arith.constant 0 : i32
    return %arg0, %arg2 : i32, i32
  }
  func.func @transform_1(%arg0: i32, %arg1: i32, %arg2: i32) -> (i32, i32) {
    %c0_i32 = arith.constant 0 : i32
    return %arg2, %arg1 : i32, i32
  }
  func.func @transform_2(%arg0: i32, %arg1: i32, %arg2: i32) -> (i32, i32) {
    %c0_i32 = arith.constant 0 : i32
    %c0_i32_0 = arith.constant 0 : i32
    return %c0_i32, %arg1 : i32, i32
  }
  func.func @transform_3(%arg0: i32, %arg1: i32, %arg2: i32) -> (i32, i32) {
    %c0_i32 = arith.constant 0 : i32
    return %arg0, %arg1 : i32, i32
  }
  func.func @transform_4(%arg0: i32, %arg1: i32, %arg2: i32) -> (i32, i32) {
    %c0_i32 = arith.constant 0 : i32
    return %arg0, %arg1 : i32, i32
  }
}

module attributes {stable_mosaic.version = 11 : i64} {
  func.func @_dense_kernel(%arg0: i32, %arg1: i32, %arg2: i32, %arg3: memref<16x128xbf16, #tpu.memory_space<vmem>>, %arg4: memref<128x32xbf16, #tpu.memory_space<vmem>>, %arg5: memref<1x32xf32, #tpu.memory_space<vmem>>, %arg6: memref<16x32xbf16, #tpu.memory_space<vmem>>, %arg7: memref<16x32xbf16, #tpu.memory_space<vmem>>) attributes {dimension_semantics = [#tpu.dimension_semantics<parallel>, #tpu.dimension_semantics<parallel>, #tpu.dimension_semantics<arbitrary>], iteration_bounds = array<i64: 1, 1, 1>, scalar_prefetch = 0 : i64, scratch_operands = 0 : i64, tpu.core_type = #tpu.core_type<tc>, window_params = [{transform_indices = @transform_0, window_bounds = array<i64: 16, 128>}, {transform_indices = @transform_1, window_bounds = array<i64: 128, 32>}, {transform_indices = @transform_2, window_bounds = array<i64: 1, 32>}, {transform_indices = @transform_3, window_bounds = array<i64: 16, 32>}, {transform_indices = @transform_4, window_bounds = array<i64: 16, 32>}]} {
    %c0 = arith.constant 0 : index
    %c0_0 = arith.constant 0 : index
    %0 = vector.load %arg3[%c0, %c0_0] : memref<16x128xbf16, #tpu.memory_space<vmem>>, vector<16x128xbf16>
    %c0_1 = arith.constant 0 : index
    %c0_2 = arith.constant 0 : index
    %1 = vector.load %arg4[%c0_1, %c0_2] : memref<128x32xbf16, #tpu.memory_space<vmem>>, vector<128x32xbf16>
    %cst = arith.constant dense<0.000000e+00> : vector<16x32xf32>
    %2 = tpu.matmul %0, %1, %cst {dimension_numbers = #tpu.dot_dimension_numbers<[1], [0], [0], [1], [0, 0, 1, 1], [], []>} : vector<16x128xbf16>, vector<128x32xbf16>, vector<16x32xf32> -> vector<16x32xf32>
    %c0_3 = arith.constant 0 : index
    %c0_4 = arith.constant 0 : index
    %3 = vector.load %arg5[%c0_3, %c0_4] : memref<1x32xf32, #tpu.memory_space<vmem>>, vector<1x32xf32>
    %4 = vector.broadcast %3 : vector<1x32xf32> to vector<16x32xf32>
    %5 = arith.addf %2, %4 : vector<16x32xf32>
    %c0_5 = arith.constant 0 : index
    %c0_6 = arith.constant 0 : index
    %6 = vector.load %arg6[%c0_5, %c0_6] : memref<16x32xbf16, #tpu.memory_space<vmem>>, vector<16x32xbf16>
    %7 = arith.extf %6 : vector<16x32xbf16> to vector<16x32xf32>
    %8 = arith.addf %5, %7 : vector<16x32xf32>
    %9 = arith.truncf %8 : vector<16x32xf32> to vector<16x32xbf16>
    %c0_7 = arith.constant 0 : index
    %c0_8 = arith.constant 0 : index
    %10 = vector.load %arg7[%c0_7, %c0_8] : memref<16x32xbf16, #tpu.memory_space<vmem>>, vector<16x32xbf16>
    tpu.vector_store %arg7[%c0_7, %c0_8], %9 {strides = array<i32>} : memref<16x32xbf16, #tpu.memory_space<vmem>>, vector<16x32xbf16>,
    return
  }
  func.func @transform_0(%arg0: i32, %arg1: i32, %arg2: i32) -> (i32, i32) {
    %c0_i32 = arith.constant 0 : i32
    return %arg0, %arg2 : i32, i32
  }
  func.func @transform_1(%arg0: i32, %arg1: i32, %arg2: i32) -> (i32, i32) {
    %c0_i32 = arith.constant 0 : i32
    return %arg2, %arg1 : i32, i32
  }
  func.func @transform_2(%arg0: i32, %arg1: i32, %arg2: i32) -> (i32, i32) {
    %c0_i32 = arith.constant 0 : i32
    %c0_i32_0 = arith.constant 0 : i32
    return %c0_i32, %arg1 : i32, i32
  }
  func.func @transform_3(%arg0: i32, %arg1: i32, %arg2: i32) -> (i32, i32) {
    %c0_i32 = arith.constant 0 : i32
    return %arg0, %arg1 : i32, i32
  }
  func.func @transform_4(%arg0: i32, %arg1: i32, %arg2: i32) -> (i32, i32) {
    %c0_i32 = arith.constant 0 : i32
    return %arg0, %arg1 : i32, i32
  }
}

module attributes {stable_mosaic.version = 11 : i64} {
  func.func @_dense_kernel(%arg0: i32, %arg1: i32, %arg2: i32, %arg3: memref<16x32xbf16, #tpu.memory_space<vmem>>, %arg4: memref<32x128xbf16, #tpu.memory_space<vmem>>, %arg5: memref<1x128xf32, #tpu.memory_space<vmem>>, %arg6: memref<1x32xf32, #tpu.memory_space<vmem>>, %arg7: memref<1x32xf32, #tpu.memory_space<vmem>>, %arg8: memref<16x128xbf16, #tpu.memory_space<vmem>>) attributes {dimension_semantics = [#tpu.dimension_semantics<parallel>, #tpu.dimension_semantics<parallel>, #tpu.dimension_semantics<arbitrary>], iteration_bounds = array<i64: 1, 1, 1>, scalar_prefetch = 0 : i64, scratch_operands = 0 : i64, tpu.core_type = #tpu.core_type<tc>, window_params = [{transform_indices = @transform_0, window_bounds = array<i64: 16, 32>}, {transform_indices = @transform_1, window_bounds = array<i64: 32, 128>}, {transform_indices = @transform_2, window_bounds = array<i64: 1, 128>}, {pipeline_mode = #tpu.pipeline_mode<synchronous>, transform_indices = @transform_3, window_bounds = array<i64: 1, 32>}, {pipeline_mode = #tpu.pipeline_mode<synchronous>, transform_indices = @transform_4, window_bounds = array<i64: 1, 32>}, {transform_indices = @transform_5, window_bounds = array<i64: 16, 128>}]} {
    %c0 = arith.constant 0 : index
    %c0_0 = arith.constant 0 : index
    %0 = vector.load %arg3[%c0, %c0_0] : memref<16x32xbf16, #tpu.memory_space<vmem>>, vector<16x32xbf16>
    %1 = arith.extf %0 : vector<16x32xbf16> to vector<16x32xf32>
    %cst = arith.constant dense<0.000000e+00> : vector<16xf32>
    %2 = vector.multi_reduction <add>, %1, %cst [1] : vector<16x32xf32> to vector<16xf32>
    %3 = vector.shape_cast %2 : vector<16xf32> to vector<16x1xf32>
    %cst_1 = arith.constant 3.200000e+01 : f32
    %4 = vector.broadcast %cst_1 : f32 to vector<16x1xf32>
    %5 = arith.divf %3, %4 : vector<16x1xf32>
    %6 = vector.broadcast %5 : vector<16x1xf32> to vector<16x32xf32>
    %7 = arith.subf %1, %6 : vector<16x32xf32>
    %8 = arith.mulf %7, %7 : vector<16x32xf32>
    %cst_2 = arith.constant dense<0.000000e+00> : vector<16xf32>
    %9 = vector.multi_reduction <add>, %8, %cst_2 [1] : vector<16x32xf32> to vector<16xf32>
    %10 = vector.shape_cast %9 : vector<16xf32> to vector<16x1xf32>
    %cst_3 = arith.constant 3.200000e+01 : f32
    %11 = vector.broadcast %cst_3 : f32 to vector<16x1xf32>
    %12 = arith.divf %10, %11 : vector<16x1xf32>
    %13 = vector.broadcast %5 : vector<16x1xf32> to vector<16x32xf32>
    %14 = arith.subf %1, %13 : vector<16x32xf32>
    %cst_4 = arith.constant 9.99999997E-7 : f32
    %15 = vector.broadcast %cst_4 : f32 to vector<16x1xf32>
    %16 = arith.addf %12, %15 : vector<16x1xf32>
    %17 = math.rsqrt %16 : vector<16x1xf32>
    %18 = vector.broadcast %17 : vector<16x1xf32> to vector<16x32xf32>
    %19 = arith.mulf %14, %18 : vector<16x32xf32>
    %c0_5 = arith.constant 0 : index
    %c0_6 = arith.constant 0 : index
    %20 = vector.load %arg6[%c0_5, %c0_6] : memref<1x32xf32, #tpu.memory_space<vmem>>, vector<1x32xf32>
    %21 = vector.broadcast %20 : vector<1x32xf32> to vector<16x32xf32>
    %22 = arith.mulf %19, %21 : vector<16x32xf32>
    %c0_7 = arith.constant 0 : index
    %c0_8 = arith.constant 0 : index
    %23 = vector.load %arg7[%c0_7, %c0_8] : memref<1x32xf32, #tpu.memory_space<vmem>>, vector<1x32xf32>
    %24 = vector.broadcast %23 : vector<1x32xf32> to vector<16x32xf32>
    %25 = arith.addf %22, %24 : vector<16x32xf32>
    %26 = arith.truncf %25 : vector<16x32xf32> to vector<16x32xbf16>
    %c0_9 = arith.constant 0 : index
    %c0_10 = arith.constant 0 : index
    %27 = vector.load %arg4[%c0_9, %c0_10] : memref<32x128xbf16, #tpu.memory_space<vmem>>, vector<32x128xbf16>
    %cst_11 = arith.constant dense<0.000000e+00> : vector<16x128xf32>
    %28 = tpu.matmul %26, %27, %cst_11 {dimension_numbers = #tpu.dot_dimension_numbers<[1], [0], [0], [1], [0, 0, 1, 1], [], []>} : vector<16x32xbf16>, vector<32x128xbf16>, vector<16x128xf32> -> vector<16x128xf32>
    %c0_12 = arith.constant 0 : index
    %c0_13 = arith.constant 0 : index
    %29 = vector.load %arg5[%c0_12, %c0_13] : memref<1x128xf32, #tpu.memory_space<vmem>>, vector<1x128xf32>
    %30 = vector.broadcast %29 : vector<1x128xf32> to vector<16x128xf32>
    %31 = arith.addf %28, %30 : vector<16x128xf32>
    %32 = arith.mulf %31, %31 : vector<16x128xf32>
    %33 = arith.mulf %31, %32 : vector<16x128xf32>
    %cst_14 = arith.constant 4.471500e-02 : f32
    %34 = vector.broadcast %cst_14 : f32 to vector<16x128xf32>
    %35 = arith.mulf %34, %33 : vector<16x128xf32>
    %36 = arith.addf %31, %35 : vector<16x128xf32>
    %cst_15 = arith.constant 0.797884583 : f32
    %37 = vector.broadcast %cst_15 : f32 to vector<16x128xf32>
    %38 = arith.mulf %37, %36 : vector<16x128xf32>
    %39 = math.tanh %38 : vector<16x128xf32>
    %cst_16 = arith.constant 1.000000e+00 : f32
    %40 = vector.broadcast %cst_16 : f32 to vector<16x128xf32>
    %41 = arith.addf %40, %39 : vector<16x128xf32>
    %cst_17 = arith.constant 5.000000e-01 : f32
    %42 = vector.broadcast %cst_17 : f32 to vector<16x128xf32>
    %43 = arith.mulf %42, %41 : vector<16x128xf32>
    %44 = arith.mulf %31, %43 : vector<16x128xf32>
    %45 = arith.truncf %44 : vector<16x128xf32> to vector<16x128xbf16>
    %c0_18 = arith.constant 0 : index
    %c0_19 = arith.constant 0 : index
    %46 = vector.load %arg8[%c0_18, %c0_19] : memref<16x128xbf16, #tpu.memory_space<vmem>>, vector<16x128xbf16>
    tpu.vector_store %arg8[%c0_18, %c0_19], %45 {strides = array<i32>} : memref<16x128xbf16, #tpu.memory_space<vmem>>, vector<16x128xbf16>,
    return
  }
  func.func @transform_0(%arg0: i32, %arg1: i32, %arg2: i32) -> (i32, i32) {
    %c0_i32 = arith.constant 0 : i32
    return %arg0, %arg2 : i32, i32
  }
  func.func @transform_1(%arg0: i32, %arg1: i32, %arg2: i32) -> (i32, i32) {
    %c0_i32 = arith.constant 0 : i32
    return %arg2, %arg1 : i32, i32
  }
  func.func @transform_2(%arg0: i32, %arg1: i32, %arg2: i32) -> (i32, i32) {
    %c0_i32 = arith.constant 0 : i32
    %c0_i32_0 = arith.constant 0 : i32
    return %c0_i32, %arg1 : i32, i32
  }
  func.func @transform_3(%arg0: i32, %arg1: i32, %arg2: i32) -> (i32, i32) {
    %c0_i32 = arith.constant 0 : i32
    %c0_i32_0 = arith.constant 0 : i32
    %c0_i32_1 = arith.constant 0 : i32
    return %c0_i32, %c0_i32_0 : i32, i32
  }
  func.func @transform_4(%arg0: i32, %arg1: i32, %arg2: i32) -> (i32, i32) {
    %c0_i32 = arith.constant 0 : i32
    %c0_i32_0 = arith.constant 0 : i32
    %c0_i32_1 = arith.constant 0 : i32
    return %c0_i32, %c0_i32_0 : i32, i32
  }
  func.func @transform_5(%arg0: i32, %arg1: i32, %arg2: i32) -> (i32, i32) {
    %c0_i32 = arith.constant 0 : i32
    return %arg0, %arg1 : i32, i32
  }
}

module attributes {stable_mosaic.version = 11 : i64} {
  func.func @_probe_head_kernel(%arg0: i32, %arg1: memref<2x8x128xbf16, #tpu.memory_space<vmem>>, %arg2: memref<1x128xf32, #tpu.memory_space<vmem>>, %arg3: memref<1x128xf32, #tpu.memory_space<vmem>>, %arg4: memref<128x128xbf16, #tpu.memory_space<vmem>>, %arg5: memref<1x128xf32, #tpu.memory_space<vmem>>, %arg6: memref<2x128xf32, #tpu.memory_space<vmem>>, %arg7: memref<2x128xf32, #tpu.memory_space<vmem>>) attributes {dimension_semantics = [#tpu.dimension_semantics<arbitrary>], iteration_bounds = array<i64: 1>, scalar_prefetch = 0 : i64, scratch_operands = 1 : i64, tpu.core_type = #tpu.core_type<tc>, window_params = [{transform_indices = @transform_0, window_bounds = array<i64: 2, 8, 128>}, {pipeline_mode = #tpu.pipeline_mode<synchronous>, transform_indices = @transform_1, window_bounds = array<i64: 1, 128>}, {pipeline_mode = #tpu.pipeline_mode<synchronous>, transform_indices = @transform_2, window_bounds = array<i64: 1, 128>}, {pipeline_mode = #tpu.pipeline_mode<synchronous>, transform_indices = @transform_3, window_bounds = array<i64: 128, 128>}, {pipeline_mode = #tpu.pipeline_mode<synchronous>, transform_indices = @transform_4, window_bounds = array<i64: 1, 128>}, {pipeline_mode = #tpu.pipeline_mode<synchronous>, transform_indices = @transform_5, window_bounds = array<i64: 2, 128>}]} {
    %c0_i32 = arith.constant 0 : i32
    %0 = arith.cmpi eq, %arg0, %c0_i32 : i32
    %1 = arith.extui %0 : i1 to i32
    %c0_i32_0 = arith.constant 0 : i32
    %2 = arith.cmpi ne, %1, %c0_i32_0 : i32
    scf.if %2 {
      %cst_9 = arith.constant 0.000000e+00 : f32
      %12 = vector.broadcast %cst_9 : f32 to vector<2x128xf32>
      %c0_10 = arith.constant 0 : index
      %c0_11 = arith.constant 0 : index
      %13 = vector.load %arg7[%c0_10, %c0_11] : memref<2x128xf32, #tpu.memory_space<vmem>>, vector<2x128xf32>
      tpu.vector_store %arg7[%c0_10, %c0_11], %12 {strides = array<i32>} : memref<2x128xf32, #tpu.memory_space<vmem>>, vector<2x128xf32>,
    } else {
    }
    %c0 = arith.constant 0 : index
    %c0_1 = arith.constant 0 : index
    %3 = vector.load %arg7[%c0, %c0_1] : memref<2x128xf32, #tpu.memory_space<vmem>>, vector<2x128xf32>
    %c0_2 = arith.constant 0 : index
    %c0_3 = arith.constant 0 : index
    %c0_4 = arith.constant 0 : index
    %4 = vector.load %arg1[%c0_2, %c0_3, %c0_4] : memref<2x8x128xbf16, #tpu.memory_space<vmem>>, vector<2x8x128xbf16>
    %5 = arith.extf %4 : vector<2x8x128xbf16> to vector<2x8x128xf32>
    %cst = arith.constant dense<0.000000e+00> : vector<2x128xf32>
    %6 = vector.multi_reduction <add>, %5, %cst [1] : vector<2x8x128xf32> to vector<2x128xf32>
    %7 = arith.addf %3, %6 : vector<2x128xf32>
    %c0_5 = arith.constant 0 : index
    %c0_6 = arith.constant 0 : index
    %8 = vector.load %arg7[%c0_5, %c0_6] : memref<2x128xf32, #tpu.memory_space<vmem>>, vector<2x128xf32>
    tpu.vector_store %arg7[%c0_5, %c0_6], %7 {strides = array<i32>} : memref<2x128xf32, #tpu.memory_space<vmem>>, vector<2x128xf32>,
    %c0_i32_7 = arith.constant 0 : i32
    %9 = arith.cmpi eq, %arg0, %c0_i32_7 : i32
    %10 = arith.extui %9 : i1 to i32
    %c0_i32_8 = arith.constant 0 : i32
    %11 = arith.cmpi ne, %10, %c0_i32_8 : i32
    scf.if %11 {
      %c0_9 = arith.constant 0 : index
      %c0_10 = arith.constant 0 : index
      %12 = vector.load %arg7[%c0_9, %c0_10] : memref<2x128xf32, #tpu.memory_space<vmem>>, vector<2x128xf32>
      %cst_11 = arith.constant 2.500000e-01 : f32
      %13 = vector.broadcast %cst_11 : f32 to vector<2x128xf32>
      %14 = arith.mulf %12, %13 : vector<2x128xf32>
      %cst_12 = arith.constant dense<0.000000e+00> : vector<128xf32>
      %15 = vector.multi_reduction <add>, %14, %cst_12 [0] : vector<2x128xf32> to vector<128xf32>
      %16 = vector.shape_cast %15 : vector<128xf32> to vector<1x128xf32>
      %cst_13 = arith.constant 2.000000e+00 : f32
      %17 = vector.broadcast %cst_13 : f32 to vector<1x128xf32>
      %18 = arith.divf %16, %17 : vector<1x128xf32>
      %19 = vector.broadcast %18 : vector<1x128xf32> to vector<2x128xf32>
      %20 = arith.subf %14, %19 : vector<2x128xf32>
      %21 = arith.mulf %20, %20 : vector<2x128xf32>
      %cst_14 = arith.constant dense<0.000000e+00> : vector<128xf32>
      %22 = vector.multi_reduction <add>, %21, %cst_14 [0] : vector<2x128xf32> to vector<128xf32>
      %23 = vector.shape_cast %22 : vector<128xf32> to vector<1x128xf32>
      %cst_15 = arith.constant 2.000000e+00 : f32
      %24 = vector.broadcast %cst_15 : f32 to vector<1x128xf32>
      %25 = arith.divf %23, %24 : vector<1x128xf32>
      %26 = vector.broadcast %18 : vector<1x128xf32> to vector<2x128xf32>
      %27 = arith.subf %14, %26 : vector<2x128xf32>
      %cst_16 = arith.constant 9.99999974E-6 : f32
      %28 = vector.broadcast %cst_16 : f32 to vector<1x128xf32>
      %29 = arith.addf %25, %28 : vector<1x128xf32>
      %30 = math.rsqrt %29 : vector<1x128xf32>
      %31 = vector.broadcast %30 : vector<1x128xf32> to vector<2x128xf32>
      %32 = arith.mulf %27, %31 : vector<2x128xf32>
      %c0_17 = arith.constant 0 : index
      %c0_18 = arith.constant 0 : index
      %33 = vector.load %arg2[%c0_17, %c0_18] : memref<1x128xf32, #tpu.memory_space<vmem>>, vector<1x128xf32>
      %34 = vector.broadcast %33 : vector<1x128xf32> to vector<2x128xf32>
      %35 = arith.mulf %32, %34 : vector<2x128xf32>
      %c0_19 = arith.constant 0 : index
      %c0_20 = arith.constant 0 : index
      %36 = vector.load %arg3[%c0_19, %c0_20] : memref<1x128xf32, #tpu.memory_space<vmem>>, vector<1x128xf32>
      %37 = vector.broadcast %36 : vector<1x128xf32> to vector<2x128xf32>
      %38 = arith.addf %35, %37 : vector<2x128xf32>
      %39 = arith.truncf %38 : vector<2x128xf32> to vector<2x128xbf16>
      %c0_21 = arith.constant 0 : index
      %c0_22 = arith.constant 0 : index
      %40 = vector.load %arg4[%c0_21, %c0_22] : memref<128x128xbf16, #tpu.memory_space<vmem>>, vector<128x128xbf16>
      %cst_23 = arith.constant dense<0.000000e+00> : vector<2x128xf32>
      %41 = tpu.matmul %39, %40, %cst_23 {dimension_numbers = #tpu.dot_dimension_numbers<[1], [0], [0], [1], [0, 0, 1, 1], [], []>} : vector<2x128xbf16>, vector<128x128xbf16>, vector<2x128xf32> -> vector<2x128xf32>
      %c0_24 = arith.constant 0 : index
      %c0_25 = arith.constant 0 : index
      %42 = vector.load %arg5[%c0_24, %c0_25] : memref<1x128xf32, #tpu.memory_space<vmem>>, vector<1x128xf32>
      %43 = vector.broadcast %42 : vector<1x128xf32> to vector<2x128xf32>
      %44 = arith.addf %41, %43 : vector<2x128xf32>
      %c0_26 = arith.constant 0 : index
      %c0_27 = arith.constant 0 : index
      %45 = vector.load %arg6[%c0_26, %c0_27] : memref<2x128xf32, #tpu.memory_space<vmem>>, vector<2x128xf32>
      tpu.vector_store %arg6[%c0_26, %c0_27], %44 {strides = array<i32>} : memref<2x128xf32, #tpu.memory_space<vmem>>, vector<2x128xf32>,
    } else {
    }
    return
  }
  func.func @transform_0(%arg0: i32) -> (i32, i32, i32) {
    %c0_i32 = arith.constant 0 : i32
    %c0_i32_0 = arith.constant 0 : i32
    %c0_i32_1 = arith.constant 0 : i32
    return %c0_i32, %arg0, %c0_i32_0 : i32, i32, i32
  }
  func.func @transform_1(%arg0: i32) -> (i32, i32) {
    %c0_i32 = arith.constant 0 : i32
    %c0_i32_0 = arith.constant 0 : i32
    %c0_i32_1 = arith.constant 0 : i32
    return %c0_i32, %c0_i32_0 : i32, i32
  }
  func.func @transform_2(%arg0: i32) -> (i32, i32) {
    %c0_i32 = arith.constant 0 : i32
    %c0_i32_0 = arith.constant 0 : i32
    %c0_i32_1 = arith.constant 0 : i32
    return %c0_i32, %c0_i32_0 : i32, i32
  }
  func.func @transform_3(%arg0: i32) -> (i32, i32) {
    %c0_i32 = arith.constant 0 : i32
    %c0_i32_0 = arith.constant 0 : i32
    %c0_i32_1 = arith.constant 0 : i32
    return %c0_i32, %c0_i32_0 : i32, i32
  }
  func.func @transform_4(%arg0: i32) -> (i32, i32) {
    %c0_i32 = arith.constant 0 : i32
    %c0_i32_0 = arith.constant 0 : i32
    %c0_i32_1 = arith.constant 0 : i32
    return %c0_i32, %c0_i32_0 : i32, i32
  }
  func.func @transform_5(%arg0: i32) -> (i32, i32) {
    %c0_i32 = arith.constant 0 : i32
    %c0_i32_0 = arith.constant 0 : i32
    %c0_i32_1 = arith.constant 0 : i32
    return %c0_i32, %c0_i32_0 : i32, i32
  }
}

</mosaic_0001>

<llo_original>
// kernel: ijepa_linear_probe_forward.18
$region0: #{ijepa_linear_probe_forward.18}
  #allocation0 [shape = 'u32[]', space=smem, size = 0x4, offset = 0x4, fixed_abs, tag = 'smem constant byte address 0x4 - core index']
  #allocation1 [shape = 'u32[144,128]{1,0:T(1,128)}', space=vmem, size = 0x12000, scoped, tag = 'internal scratch']
  %s0 = inlined_call_operand.vmem [shape: bf16[16,192], index: 0, kind: input, shape index: {}]
  %s1 = inlined_call_operand.vmem [shape: bf16[192,32], index: 1, kind: input, shape index: {}]
  %s2 = inlined_call_operand.vmem [shape: f32[1,32], index: 2, kind: input, shape index: {}]
  %s3 = inlined_call_operand.vmem [shape: bf16[16,32], index: 3, kind: output, shape index: {}]
  %s4 = sld [smem:[#allocation0]]
  $region22: #{ijepa_linear_probe_forward.18} parent=0
    _
  %s6 = ssub.s32 1, %s4
  %s7 = scalar_select 0, %s6, %s4
  // Predicated region
  $region2: #{ijepa_linear_probe_forward.18} parent=0 // pred_check
    _
  $region3: #{ijepa_linear_probe_forward.18} parent=0 // pred_check_branch
    %9 = sbr.rel (0) target = $region5
  $region4: #{ijepa_linear_probe_forward.18} parent=0 // pred_region
    _
  $region5: #{ijepa_linear_probe_forward.18} parent=0 // pred_fallthru
    _
  // Predicated region
  $region6: #{ijepa_linear_probe_forward.18} parent=0 // pred_check
    _
  $region7: #{ijepa_linear_probe_forward.18} parent=0 // pred_check_branch
    %11 = sbr.rel (0) target = $region9
  $region8: #{ijepa_linear_probe_forward.18} parent=0 // pred_region
    _
  $region9: #{ijepa_linear_probe_forward.18} parent=0 // pred_fallthru
    _
  // Predicated region
  $region10: #{ijepa_linear_probe_forward.18} parent=0 // pred_check
    _
  $region11: #{ijepa_linear_probe_forward.18} parent=0 // pred_check_branch
    %13 = sbr.rel (0) target = $region13
  $region12: #{ijepa_linear_probe_forward.18} parent=0 // pred_region
    _
  $region13: #{ijepa_linear_probe_forward.18} parent=0 // pred_fallthru
    _
  %v15 = vld [vmem:[%s0] sm:$0xff]
  %v16 = vld [vmem:[%s0 + $0x8] sm:$0xff]
  %v17 = vld [vmem:[%s1] sm:$0xf]
  %v18 = vld [vmem:[%s1 + $0x4] sm:$0xf]
  %v19 = vld [vmem:[%s1 + $0x8] sm:$0xf]
  %v20 = vld [vmem:[%s1 + $0xc] sm:$0xf]
  %v21 = vld [vmem:[%s1 + $0x10] sm:$0xf]
  %v22 = vld [vmem:[%s1 + $0x14] sm:$0xf]
  %v23 = vld [vmem:[%s1 + $0x18] sm:$0xf]
  %v24 = vld [vmem:[%s1 + $0x1c] sm:$0xf]
  %v25 = vld [vmem:[%s1 + $0x20] sm:$0xf]
  %v26 = vld [vmem:[%s1 + $0x24] sm:$0xf]
  %v27 = vld [vmem:[%s1 + $0x28] sm:$0xf]
  %v28 = vld [vmem:[%s1 + $0x2c] sm:$0xf]
  %v29 = vld [vmem:[%s1 + $0x30] sm:$0xf]
  %v30 = vld [vmem:[%s1 + $0x34] sm:$0xf]
  %v31 = vld [vmem:[%s1 + $0x38] sm:$0xf]
  %v32 = vld [vmem:[%s1 + $0x3c] sm:$0xf]
  %v33 = vld [vmem:[%s1 + $0x40] sm:$0xf]
  %v34 = vld [vmem:[%s1 + $0x44] sm:$0xf]
  %v35 = vld [vmem:[%s1 + $0x48] sm:$0xf]
  %v36 = vld [vmem:[%s1 + $0x4c] sm:$0xf]
  %v37 = vld [vmem:[%s1 + $0x50] sm:$0xf]
  %v38 = vld [vmem:[%s1 + $0x54] sm:$0xf]
  %v39 = vld [vmem:[%s1 + $0x58] sm:$0xf]
  %v40 = vld [vmem:[%s1 + $0x5c] sm:$0xf]
  %v41 = vld [vmem:[%s2] sm:$0x1]
  %v43 = vlaneseq
  %v44 = vshrl.u32 %v43, 7
  %v45 = vsub.s32 0, %v44
  %v46 = vrot.slane %v41, %v45
  %v50 = vunpack.c.l.b16 %v15
  %v51 = vunpack.c.h.b16 %v15
  %v52 = vunpack.c.l.b16 %v16
  %v53 = vunpack.c.h.b16 %v16
  %v54 = vpack.c.b16 %v52, %v50
  %v55 = vpack.c.b16 %v53, %v51
  %v81 = vunpack.c.l.b16 %v17
  %v82 = vunpack.c.l.b16 %v18
  %v83 = vunpack.c.l.b16 %v19
  %v84 = vunpack.c.l.b16 %v20
  %v85 = vunpack.c.l.b16 %v21
  %v86 = vunpack.c.l.b16 %v22
  %v87 = vunpack.c.l.b16 %v23
  %v88 = vunpack.c.l.b16 %v24
  %v89 = vunpack.c.l.b16 %v25
  %v90 = vunpack.c.l.b16 %v26
  %v91 = vunpack.c.l.b16 %v27
  %v92 = vunpack.c.l.b16 %v28
  %v93 = vunpack.c.l.b16 %v29
  %v94 = vunpack.c.l.b16 %v30
  %v95 = vunpack.c.l.b16 %v31
  %v96 = vunpack.c.l.b16 %v32
  %v97 = vunpack.c.l.b16 %v33
  %v98 = vunpack.c.l.b16 %v34
  %v99 = vunpack.c.l.b16 %v35
  %v100 = vunpack.c.l.b16 %v36
  %v101 = vunpack.c.l.b16 %v37
  %v102 = vunpack.c.l.b16 %v38
  %v103 = vunpack.c.l.b16 %v39
  %v104 = vunpack.c.l.b16 %v40
  %v105 = vpack.c.b16 %v82, %v81
  %v106 = vpack.c.b16 %v84, %v83
  %v107 = vpack.c.b16 %v86, %v85
  %v108 = vpack.c.b16 %v88, %v87
  %v109 = vpack.c.b16 %v90, %v89
  %v110 = vpack.c.b16 %v92, %v91
  %v111 = vpack.c.b16 %v94, %v93
  %v112 = vpack.c.b16 %v96, %v95
  %v113 = vpack.c.b16 %v98, %v97
  %v114 = vpack.c.b16 %v100, %v99
  %v115 = vpack.c.b16 %v102, %v101
  %v116 = vpack.c.b16 %v104, %v103
  %vm129 = vcmask 523264
  %v131 = vsel %vm129, %v55, 0
  %133 = vmatprep.subr.bf16.mxu0 0
  %134 = vmatpush1.bf16.msra.mxu0 %v112
  %135 = vmatprep.subr.bf16.mxu0 0
  %136 = vmatpush1.bf16.msra.mxu0 %v111
  %137 = vmatprep.subr.bf16.mxu0 0
  %138 = vmatpush1.bf16.msra.mxu0 %v110
  %139 = vmatprep.subr.bf16.mxu0 0
  %140 = vmatpush1.bf16.msra.mxu0 %v109
  %141 = vmatprep.subr.bf16.mxu0 0
  %142 = vmatpush1.bf16.msra.mxu0 %v108
  %143 = vmatprep.subr.bf16.mxu0 0
  %144 = vmatpush1.bf16.msra.mxu0 %v107
  %145 = vmatprep.subr.bf16.mxu0 0
  %146 = vmatpush1.bf16.msra.mxu0 %v106
  %147 = vmatprep.subr.bf16.mxu0 0
  %148 = vmatpush1.bf16.msra.mxu0 %v105
  %149 = vmatprep.subr.bf16.mxu0 0
  %150 = vmatpush2.bf16.msra.mxu0 0
  %151 = vmatprep.subr.bf16.mxu0 0
  %152 = vmatpush2.bf16.msra.mxu0 0
  %153 = vmatprep.subr.bf16.mxu0 0
  %154 = vmatpush2.bf16.msra.mxu0 0
  %155 = vmatprep.subr.bf16.mxu0 0
  %156 = vmatpush2.bf16.msra.mxu0 0
  %157 = vmatprep.subr.bf16.mxu0 0
  %158 = vmatpush2.bf16.msra.mxu0 %v116
  %159 = vmatprep.subr.bf16.mxu0 0
  %160 = vmatpush2.bf16.msra.mxu0 %v115
  %161 = vmatprep.subr.bf16.mxu0 0
  %162 = vmatpush2.bf16.msra.mxu0 %v114
  %163 = vmatprep.subr.bf16.mxu0 0
  %164 = vmatpush2.bf16.msra.mxu0 %v113
  %165 = vmatprep.mubr.bf16.mxu0 %v131
  %166 = vmatmul.mubr.bf16.gmra.mxu0 %v54
  %v167 = vpop.f32.mrf.mxu0
  %v168 = vadd.f32 %v46, %v167
  %v169 = vpop.f32.mrf.mxu0
  %v170 = vpop.f32.mrf.mxu0
  %v171 = vadd.f32 %v46, %v170
  %v172 = vpop.f32.mrf.mxu0
  %173 = vdwg.mxu0
  %v174 = vpack.c.bf16 %v171, %v168
  %v176 = vunpack.c.l.b16 %v174
  %v177 = vunpack.c.h.b16 %v174
  %v178 = vpack.c.b16 %v176, %v176
  %v179 = vpack.c.b16 %v177, %v177
  %vm182 = vcmask 257024
  %183 = vst.msk [vmem:[%s3] sm:$0xf] %vm182, %v178
  %184 = vst.msk [vmem:[%s3 + $0x4] sm:$0xf] %vm182, %v179
  // Predicated region
  $region14: #{ijepa_linear_probe_forward.18} parent=0 // pred_check
    _
  $region15: #{ijepa_linear_probe_forward.18} parent=0 // pred_check_branch
    %186 = sbr.rel (0) target = $region17
  $region16: #{ijepa_linear_probe_forward.18} parent=0 // pred_region
    _
  $region17: #{ijepa_linear_probe_forward.18} parent=0 // pred_fallthru
    _
  // Predicated region
  $region18: #{ijepa_linear_probe_forward.18} parent=0 // pred_check
    _
  $region19: #{ijepa_linear_probe_forward.18} parent=0 // pred_check_branch
    %188 = sbr.rel (0) target = $region21
  $region20: #{ijepa_linear_probe_forward.18} parent=0 // pred_region
    _
  $region21: #{ijepa_linear_probe_forward.18} parent=0 // pred_fallthru
    _

// kernel: ijepa_linear_probe_forward.19
$region0: #{ijepa_linear_probe_forward.19}
  #allocation0 [shape = 'u32[]', space=smem, size = 0x4, offset = 0x4, fixed_abs, tag = 'smem constant byte address 0x4 - core index']
  #allocation1 [shape = 'u32[144,128]{1,0:T(1,128)}', space=vmem, size = 0x12000, scoped, tag = 'internal scratch']
  %s0 = inlined_call_operand.vmem [shape: bf16[16,32], index: 0, kind: input, shape index: {}]
  %s1 = inlined_call_operand.vmem [shape: bf16[32,96], index: 1, kind: input, shape index: {}]
  %s2 = inlined_call_operand.vmem [shape: f32[1,96], index: 2, kind: input, shape index: {}]
  %s3 = inlined_call_operand.vmem [shape: f32[1,32], index: 3, kind: input, shape index: {}]
  %s4 = inlined_call_operand.vmem [shape: f32[1,32], index: 4, kind: input, shape index: {}]
  %s5 = inlined_call_operand.vmem [shape: bf16[16,96], index: 5, kind: output, shape index: {}]
  %s6 = sld [smem:[#allocation0]]
  $region30: #{ijepa_linear_probe_forward.19} parent=0
    _
  %s8 = ssub.s32 1, %s6
  %s9 = scalar_select 0, %s8, %s6
  // Predicated region
  $region2: #{ijepa_linear_probe_forward.19} parent=0 // pred_check
    _
  $region3: #{ijepa_linear_probe_forward.19} parent=0 // pred_check_branch
    %11 = sbr.rel (0) target = $region5
  $region4: #{ijepa_linear_probe_forward.19} parent=0 // pred_region
    _
  $region5: #{ijepa_linear_probe_forward.19} parent=0 // pred_fallthru
    _
  // Predicated region
  $region6: #{ijepa_linear_probe_forward.19} parent=0 // pred_check
    _
  $region7: #{ijepa_linear_probe_forward.19} parent=0 // pred_check_branch
    %13 = sbr.rel (0) target = $region9
  $region8: #{ijepa_linear_probe_forward.19} parent=0 // pred_region
    _
  $region9: #{ijepa_linear_probe_forward.19} parent=0 // pred_fallthru
    _
  // Predicated region
  $region10: #{ijepa_linear_probe_forward.19} parent=0 // pred_check
    _
  $region11: #{ijepa_linear_probe_forward.19} parent=0 // pred_check_branch
    %15 = sbr.rel (0) target = $region13
  $region12: #{ijepa_linear_probe_forward.19} parent=0 // pred_region
    _
  $region13: #{ijepa_linear_probe_forward.19} parent=0 // pred_fallthru
    _
  // Predicated region
  $region14: #{ijepa_linear_probe_forward.19} parent=0 // pred_check
    _
  $region15: #{ijepa_linear_probe_forward.19} parent=0 // pred_check_branch
    %17 = sbr.rel (0) target = $region17
  $region16: #{ijepa_linear_probe_forward.19} parent=0 // pred_region
    _
  $region17: #{ijepa_linear_probe_forward.19} parent=0 // pred_fallthru
    _
  // Predicated region
  $region18: #{ijepa_linear_probe_forward.19} parent=0 // pred_check
    _
  $region19: #{ijepa_linear_probe_forward.19} parent=0 // pred_check_branch
    %19 = sbr.rel (0) target = $region21
  $region20: #{ijepa_linear_probe_forward.19} parent=0 // pred_region
    _
  $region21: #{ijepa_linear_probe_forward.19} parent=0 // pred_fallthru
    _
  %v21 = vld [vmem:[%s0] sm:$0xf]
  %v22 = vld [vmem:[%s0 + $0x4] sm:$0xf]
  %v23 = vunpack.c.l.bf16 %v21
  %v24 = vunpack.c.l.bf16 %v22
  %vm25 = vcmask 261120
  %v26 = vsel %vm25, %v23, 0.0
  %27 = vadd.xlane.f32.xlu0 %v26
  %v28 = vpop.xlane.xlu0 %27
  %v29 = vsel %vm25, %v24, 0.0
  %30 = vadd.xlane.f32.xlu0 %v29
  %v31 = vpop.xlane.xlu0 %30
  %v32 = vrcp.pop 32.0
  %v33 = vmul.f32 %v28, %v32
  %v34 = vmul.f32 %v31, %v32
  %v35 = vsub.f32 %v23, %v33
  %v36 = vsub.f32 %v24, %v34
  %v37 = vmul.f32 %v35, %v35
  %v38 = vmul.f32 %v36, %v36
  %v39 = vsel %vm25, %v37, 0.0
  %40 = vadd.xlane.f32.xlu0 %v39
  %v41 = vpop.xlane.xlu0 %40
  %v42 = vsel %vm25, %v38, 0.0
  %43 = vadd.xlane.f32.xlu0 %v42
  %v44 = vpop.xlane.xlu0 %43
  %v45 = vmul.f32 %v41, %v32
  %v46 = vmul.f32 %v44, %v32
  %v47 = vadd.f32 %v45, 1e-06
  %v48 = vadd.f32 %v46, 1e-06
  %v49 = vrsqrt.pop %v47
  %v50 = vrsqrt.pop %v48
  %v51 = vmul.f32 %v35, %v49
  %v52 = vmul.f32 %v36, %v50
  %v53 = vld [vmem:[%s3] sm:$0x1]
  %v55 = vlaneseq
  %v56 = vshrl.u32 %v55, 7
  %v57 = vsub.s32 0, %v56
  %v58 = vrot.slane %v53, %v57
  %v60 = vmul.f32 %v51, %v58
  %v61 = vmul.f32 %v52, %v58
  %v62 = vld [vmem:[%s4] sm:$0x1]
  %v64 = vlaneseq
  %v65 = vshrl.u32 %v64, 7
  %v66 = vsub.s32 0, %v65
  %v67 = vrot.slane %v62, %v66
  %v69 = vadd.f32 %v60, %v67
  %v70 = vadd.f32 %v61, %v67
  %v71 = vpack.c.bf16 %v70, %v69
  %v72 = vld [vmem:[%s1] sm:$0xf]
  %v73 = vld [vmem:[%s1 + $0x4] sm:$0xf]
  %v74 = vld [vmem:[%s1 + $0x8] sm:$0xf]
  %v75 = vld [vmem:[%s1 + $0xc] sm:$0xf]
  %v76 = vld [vmem:[%s2] sm:$0x1]
  %v78 = vlaneseq
  %v79 = vshrl.u32 %v78, 7
  %v80 = vsub.s32 0, %v79
  %v81 = vrot.slane %v76, %v80
  %v87 = vunpack.c.l.b16 %v72
  %v88 = vunpack.c.l.b16 %v73
  %v89 = vunpack.c.l.b16 %v74
  %v90 = vunpack.c.l.b16 %v75
  %v91 = vpack.c.b16 %v88, %v87
  %v92 = vpack.c.b16 %v90, %v89
  %v96 = vsel %vm25, %v71, 0
  %98 = vmatprep.subr.bf16.mxu0 0
  %99 = vmatpush1.bf16.msra.mxu0 0
  %100 = vmatprep.subr.bf16.mxu0 0
  %101 = vmatpush1.bf16.msra.mxu0 0
  %102 = vmatprep.subr.bf16.mxu0 0
  %103 = vmatpush1.bf16.msra.mxu0 0
  %104 = vmatprep.subr.bf16.mxu0 0
  %105 = vmatpush1.bf16.msra.mxu0 0
  %106 = vmatprep.subr.bf16.mxu0 0
  %107 = vmatpush1.bf16.msra.mxu0 0
  %108 = vmatprep.subr.bf16.mxu0 0
  %109 = vmatpush1.bf16.msra.mxu0 0
  %110 = vmatprep.subr.bf16.mxu0 0
  %111 = vmatpush1.bf16.msra.mxu0 %v92
  %112 = vmatprep.subr.bf16.mxu0 0
  %113 = vmatpush1.bf16.msra.mxu0 %v91
  %114 = vmatprep.subr.bf16.mxu0 0
  %115 = vmatpush2.bf16.msra.mxu0 0
  %116 = vmatprep.subr.bf16.mxu0 0
  %117 = vmatpush2.bf16.msra.mxu0 0
  %118 = vmatprep.subr.bf16.mxu0 0
  %119 = vmatpush2.bf16.msra.mxu0 0
  %120 = vmatprep.subr.bf16.mxu0 0
  %121 = vmatpush2.bf16.msra.mxu0 0
  %122 = vmatprep.subr.bf16.mxu0 0
  %123 = vmatpush2.bf16.msra.mxu0 0
  %124 = vmatprep.subr.bf16.mxu0 0
  %125 = vmatpush2.bf16.msra.mxu0 0
  %126 = vmatprep.subr.bf16.mxu0 0
  %127 = vmatpush2.bf16.msra.mxu0 0
  %128 = vmatprep.subr.bf16.mxu0 0
  %129 = vmatpush2.bf16.msra.mxu0 0
  %130 = vmatprep.mubr.bf16.mxu0 0
  %131 = vmatmul.mubr.bf16.gmra.mxu0 %v96
  %v132 = vpop.f32.mrf.mxu0
  %v133 = vadd.f32 %v81, %v132
  %v134 = vpop.f32.mrf.mxu0
  %v135 = vpop.f32.mrf.mxu0
  %v136 = vadd.f32 %v81, %v135
  %v137 = vpop.f32.mrf.mxu0
  %138 = vdwg.mxu0
  %v139 = vpack.c.bf16 %v136, %v133
  %v141 = vunpack.c.l.b16 %v139
  %v142 = vunpack.c.h.b16 %v139
  %v143 = vpack.c.b16 %v141, %v141
  %v144 = vpack.c.b16 %v142, %v142
  %vm147 = vcmask 781312
  %148 = vst.msk [vmem:[%s5] sm:$0xf] %vm147, %v143
  %149 = vst.msk [vmem:[%s5 + $0x4] sm:$0xf] %vm147, %v144
  // Predicated region
  $region22: #{ijepa_linear_probe_forward.19} parent=0 // pred_check
    _
  $region23: #{ijepa_linear_probe_forward.19} parent=0 // pred_check_branch
    %151 = sbr.rel (0) target = $region25
  $region24: #{ijepa_linear_probe_forward.19} parent=0 // pred_region
    _
  $region25: #{ijepa_linear_probe_forward.19} parent=0 // pred_fallthru
    _
  // Predicated region
  $region26: #{ijepa_linear_probe_forward.19} parent=0 // pred_check
    _
  $region27: #{ijepa_linear_probe_forward.19} parent=0 // pred_check_branch
    %153 = sbr.rel (0) target = $region29
  $region28: #{ijepa_linear_probe_forward.19} parent=0 // pred_region
    _
  $region29: #{ijepa_linear_probe_forward.19} parent=0 // pred_fallthru
    _

// kernel: ijepa_linear_probe_forward.20
$region0: #{ijepa_linear_probe_forward.20}
  #allocation0 [shape = 'u32[]', space=smem, size = 0x4, offset = 0x4, fixed_abs, tag = 'smem constant byte address 0x4 - core index']
  #allocation1 [shape = 'u32[144,128]{1,0:T(1,128)}', space=vmem, size = 0x12000, scoped, tag = 'internal scratch']
  %s0 = inlined_call_operand.vmem [shape: bf16[16,32], index: 0, kind: input, shape index: {}]
  %s1 = inlined_call_operand.vmem [shape: bf16[32,32], index: 1, kind: input, shape index: {}]
  %s2 = inlined_call_operand.vmem [shape: f32[1,32], index: 2, kind: input, shape index: {}]
  %s3 = inlined_call_operand.vmem [shape: bf16[16,32], index: 3, kind: input, shape index: {}]
  %s4 = inlined_call_operand.vmem [shape: bf16[16,32], index: 4, kind: output, shape index: {}]
  %s5 = sld [smem:[#allocation0]]
  $region26: #{ijepa_linear_probe_forward.20} parent=0
    _
  %s7 = ssub.s32 1, %s5
  %s8 = scalar_select 0, %s7, %s5
  // Predicated region
  $region2: #{ijepa_linear_probe_forward.20} parent=0 // pred_check
    _
  $region3: #{ijepa_linear_probe_forward.20} parent=0 // pred_check_branch
    %10 = sbr.rel (0) target = $region5
  $region4: #{ijepa_linear_probe_forward.20} parent=0 // pred_region
    _
  $region5: #{ijepa_linear_probe_forward.20} parent=0 // pred_fallthru
    _
  // Predicated region
  $region6: #{ijepa_linear_probe_forward.20} parent=0 // pred_check
    _
  $region7: #{ijepa_linear_probe_forward.20} parent=0 // pred_check_branch
    %12 = sbr.rel (0) target = $region9
  $region8: #{ijepa_linear_probe_forward.20} parent=0 // pred_region
    _
  $region9: #{ijepa_linear_probe_forward.20} parent=0 // pred_fallthru
    _
  // Predicated region
  $region10: #{ijepa_linear_probe_forward.20} parent=0 // pred_check
    _
  $region11: #{ijepa_linear_probe_forward.20} parent=0 // pred_check_branch
    %14 = sbr.rel (0) target = $region13
  $region12: #{ijepa_linear_probe_forward.20} parent=0 // pred_region
    _
  $region13: #{ijepa_linear_probe_forward.20} parent=0 // pred_fallthru
    _
  // Predicated region
  $region14: #{ijepa_linear_probe_forward.20} parent=0 // pred_check
    _
  $region15: #{ijepa_linear_probe_forward.20} parent=0 // pred_check_branch
    %16 = sbr.rel (0) target = $region17
  $region16: #{ijepa_linear_probe_forward.20} parent=0 // pred_region
    _
  $region17: #{ijepa_linear_probe_forward.20} parent=0 // pred_fallthru
    _
  %v18 = vld [vmem:[%s0] sm:$0xf]
  %v19 = vld [vmem:[%s0 + $0x4] sm:$0xf]
  %v20 = vld [vmem:[%s1] sm:$0xf]
  %v21 = vld [vmem:[%s1 + $0x4] sm:$0xf]
  %v22 = vld [vmem:[%s1 + $0x8] sm:$0xf]
  %v23 = vld [vmem:[%s1 + $0xc] sm:$0xf]
  %v24 = vld [vmem:[%s2] sm:$0x1]
  %v26 = vlaneseq
  %v27 = vshrl.u32 %v26, 7
  %v28 = vsub.s32 0, %v27
  %v29 = vrot.slane %v24, %v28
  %v33 = vunpack.c.l.b16 %v18
  %v34 = vunpack.c.l.b16 %v19
  %v35 = vpack.c.b16 %v34, %v33
  %v40 = vunpack.c.l.b16 %v20
  %v41 = vunpack.c.l.b16 %v21
  %v42 = vunpack.c.l.b16 %v22
  %v43 = vunpack.c.l.b16 %v23
  %v44 = vpack.c.b16 %v41, %v40
  %v45 = vpack.c.b16 %v43, %v42
  %vm48 = vcmask 261120
  %v50 = vsel %vm48, %v35, 0
  %52 = vmatprep.subr.bf16.mxu0 0
  %53 = vmatpush1.bf16.msra.mxu0 0
  %54 = vmatprep.subr.bf16.mxu0 0
  %55 = vmatpush1.bf16.msra.mxu0 0
  %56 = vmatprep.subr.bf16.mxu0 0
  %57 = vmatpush1.bf16.msra.mxu0 0
  %58 = vmatprep.subr.bf16.mxu0 0
  %59 = vmatpush1.bf16.msra.mxu0 0
  %60 = vmatprep.subr.bf16.mxu0 0
  %61 = vmatpush1.bf16.msra.mxu0 0
  %62 = vmatprep.subr.bf16.mxu0 0
  %63 = vmatpush1.bf16.msra.mxu0 0
  %64 = vmatprep.subr.bf16.mxu0 0
  %65 = vmatpush1.bf16.msra.mxu0 %v45
  %66 = vmatprep.subr.bf16.mxu0 0
  %67 = vmatpush1.bf16.msra.mxu0 %v44
  %68 = vmatprep.subr.bf16.mxu0 0
  %69 = vmatpush2.bf16.msra.mxu0 0
  %70 = vmatprep.subr.bf16.mxu0 0
  %71 = vmatpush2.bf16.msra.mxu0 0
  %72 = vmatprep.subr.bf16.mxu0 0
  %73 = vmatpush2.bf16.msra.mxu0 0
  %74 = vmatprep.subr.bf16.mxu0 0
  %75 = vmatpush2.bf16.msra.mxu0 0
  %76 = vmatprep.subr.bf16.mxu0 0
  %77 = vmatpush2.bf16.msra.mxu0 0
  %78 = vmatprep.subr.bf16.mxu0 0
  %79 = vmatpush2.bf16.msra.mxu0 0
  %80 = vmatprep.subr.bf16.mxu0 0
  %81 = vmatpush2.bf16.msra.mxu0 0
  %82 = vmatprep.subr.bf16.mxu0 0
  %83 = vmatpush2.bf16.msra.mxu0 0
  %84 = vmatprep.mubr.bf16.mxu0 0
  %85 = vmatmul.mubr.bf16.gmra.mxu0 %v50
  %v86 = vpop.f32.mrf.mxu0
  %v87 = vadd.f32 %v29, %v86
  %v88 = vpop.f32.mrf.mxu0
  %v89 = vpop.f32.mrf.mxu0
  %v90 = vadd.f32 %v29, %v89
  %v91 = vpop.f32.mrf.mxu0
  %92 = vdwg.mxu0
  %v93 = vld [vmem:[%s3] sm:$0xf]
  %v94 = vld [vmem:[%s3 + $0x4] sm:$0xf]
  %v95 = vunpack.c.l.bf16 %v93
  %v96 = vunpack.c.l.bf16 %v94
  %v97 = vadd.f32 %v87, %v95
  %v98 = vadd.f32 %v90, %v96
  %v99 = vpack.c.bf16 %v98, %v97
  %v101 = vunpack.c.l.b16 %v99
  %v102 = vunpack.c.h.b16 %v99
  %v103 = vpack.c.b16 %v101, %v101
  %v104 = vpack.c.b16 %v102, %v102
  %vm107 = vcmask 257024
  %108 = vst.msk [vmem:[%s4] sm:$0xf] %vm107, %v103
  %109 = vst.msk [vmem:[%s4 + $0x4] sm:$0xf] %vm107, %v104
  // Predicated region
  $region18: #{ijepa_linear_probe_forward.20} parent=0 // pred_check
    _
  $region19: #{ijepa_linear_probe_forward.20} parent=0 // pred_check_branch
    %111 = sbr.rel (0) target = $region21
  $region20: #{ijepa_linear_probe_forward.20} parent=0 // pred_region
    _
  $region21: #{ijepa_linear_probe_forward.20} parent=0 // pred_fallthru
    _
  // Predicated region
  $region22: #{ijepa_linear_probe_forward.20} parent=0 // pred_check
    _
  $region23: #{ijepa_linear_probe_forward.20} parent=0 // pred_check_branch
    %113 = sbr.rel (0) target = $region25
  $region24: #{ijepa_linear_probe_forward.20} parent=0 // pred_region
    _
  $region25: #{ijepa_linear_probe_forward.20} parent=0 // pred_fallthru
    _

// kernel: ijepa_linear_probe_forward.22
$region0: #{ijepa_linear_probe_forward.22}
  #allocation0 [shape = 'u32[]', space=smem, size = 0x4, offset = 0x4, fixed_abs, tag = 'smem constant byte address 0x4 - core index']
  #allocation1 [shape = 'u32[144,128]{1,0:T(1,128)}', space=vmem, size = 0x12000, scoped, tag = 'internal scratch']
  %s0 = inlined_call_operand.vmem [shape: bf16[16,128], index: 0, kind: input, shape index: {}]
  %s1 = inlined_call_operand.vmem [shape: bf16[128,32], index: 1, kind: input, shape index: {}]
  %s2 = inlined_call_operand.vmem [shape: f32[1,32], index: 2, kind: input, shape index: {}]
  %s3 = inlined_call_operand.vmem [shape: bf16[16,32], index: 3, kind: input, shape index: {}]
  %s4 = inlined_call_operand.vmem [shape: bf16[16,32], index: 4, kind: output, shape index: {}]
  %s5 = sld [smem:[#allocation0]]
  $region26: #{ijepa_linear_probe_forward.22} parent=0
    _
  %s7 = ssub.s32 1, %s5
  %s8 = scalar_select 0, %s7, %s5
  // Predicated region
  $region2: #{ijepa_linear_probe_forward.22} parent=0 // pred_check
    _
  $region3: #{ijepa_linear_probe_forward.22} parent=0 // pred_check_branch
    %10 = sbr.rel (0) target = $region5
  $region4: #{ijepa_linear_probe_forward.22} parent=0 // pred_region
    _
  $region5: #{ijepa_linear_probe_forward.22} parent=0 // pred_fallthru
    _
  // Predicated region
  $region6: #{ijepa_linear_probe_forward.22} parent=0 // pred_check
    _
  $region7: #{ijepa_linear_probe_forward.22} parent=0 // pred_check_branch
    %12 = sbr.rel (0) target = $region9
  $region8: #{ijepa_linear_probe_forward.22} parent=0 // pred_region
    _
  $region9: #{ijepa_linear_probe_forward.22} parent=0 // pred_fallthru
    _
  // Predicated region
  $region10: #{ijepa_linear_probe_forward.22} parent=0 // pred_check
    _
  $region11: #{ijepa_linear_probe_forward.22} parent=0 // pred_check_branch
    %14 = sbr.rel (0) target = $region13
  $region12: #{ijepa_linear_probe_forward.22} parent=0 // pred_region
    _
  $region13: #{ijepa_linear_probe_forward.22} parent=0 // pred_fallthru
    _
  // Predicated region
  $region14: #{ijepa_linear_probe_forward.22} parent=0 // pred_check
    _
  $region15: #{ijepa_linear_probe_forward.22} parent=0 // pred_check_branch
    %16 = sbr.rel (0) target = $region17
  $region16: #{ijepa_linear_probe_forward.22} parent=0 // pred_region
    _
  $region17: #{ijepa_linear_probe_forward.22} parent=0 // pred_fallthru
    _
  %v18 = vld [vmem:[%s0] sm:$0xf]
  %v19 = vld [vmem:[%s0 + $0x4] sm:$0xf]
  %v20 = vld [vmem:[%s1] sm:$0xf]
  %v21 = vld [vmem:[%s1 + $0x4] sm:$0xf]
  %v22 = vld [vmem:[%s1 + $0x8] sm:$0xf]
  %v23 = vld [vmem:[%s1 + $0xc] sm:$0xf]
  %v24 = vld [vmem:[%s1 + $0x10] sm:$0xf]
  %v25 = vld [vmem:[%s1 + $0x14] sm:$0xf]
  %v26 = vld [vmem:[%s1 + $0x18] sm:$0xf]
  %v27 = vld [vmem:[%s1 + $0x1c] sm:$0xf]
  %v28 = vld [vmem:[%s1 + $0x20] sm:$0xf]
  %v29 = vld [vmem:[%s1 + $0x24] sm:$0xf]
  %v30 = vld [vmem:[%s1 + $0x28] sm:$0xf]
  %v31 = vld [vmem:[%s1 + $0x2c] sm:$0xf]
  %v32 = vld [vmem:[%s1 + $0x30] sm:$0xf]
  %v33 = vld [vmem:[%s1 + $0x34] sm:$0xf]
  %v34 = vld [vmem:[%s1 + $0x38] sm:$0xf]
  %v35 = vld [vmem:[%s1 + $0x3c] sm:$0xf]
  %v36 = vld [vmem:[%s2] sm:$0x1]
  %v38 = vlaneseq
  %v39 = vshrl.u32 %v38, 7
  %v40 = vsub.s32 0, %v39
  %v41 = vrot.slane %v36, %v40
  %v45 = vunpack.c.l.b16 %v18
  %v46 = vunpack.c.l.b16 %v19
  %v47 = vpack.c.b16 %v46, %v45
  %v65 = vunpack.c.l.b16 %v20
  %v66 = vunpack.c.l.b16 %v21
  %v67 = vunpack.c.l.b16 %v22
  %v68 = vunpack.c.l.b16 %v23
  %v69 = vunpack.c.l.b16 %v24
  %v70 = vunpack.c.l.b16 %v25
  %v71 = vunpack.c.l.b16 %v26
  %v72 = vunpack.c.l.b16 %v27
  %v73 = vunpack.c.l.b16 %v28
  %v74 = vunpack.c.l.b16 %v29
  %v75 = vunpack.c.l.b16 %v30
  %v76 = vunpack.c.l.b16 %v31
  %v77 = vunpack.c.l.b16 %v32
  %v78 = vunpack.c.l.b16 %v33
  %v79 = vunpack.c.l.b16 %v34
  %v80 = vunpack.c.l.b16 %v35
  %v81 = vpack.c.b16 %v66, %v65
  %v82 = vpack.c.b16 %v68, %v67
  %v83 = vpack.c.b16 %v70, %v69
  %v84 = vpack.c.b16 %v72, %v71
  %v85 = vpack.c.b16 %v74, %v73
  %v86 = vpack.c.b16 %v76, %v75
  %v87 = vpack.c.b16 %v78, %v77
  %v88 = vpack.c.b16 %v80, %v79
  %97 = vmatprep.subr.bf16.mxu0 0
  %98 = vmatpush1.bf16.msra.mxu0 %v88
  %99 = vmatprep.subr.bf16.mxu0 0
  %100 = vmatpush1.bf16.msra.mxu0 %v87
  %101 = vmatprep.subr.bf16.mxu0 0
  %102 = vmatpush1.bf16.msra.mxu0 %v86
  %103 = vmatprep.subr.bf16.mxu0 0
  %104 = vmatpush1.bf16.msra.mxu0 %v85
  %105 = vmatprep.subr.bf16.mxu0 0
  %106 = vmatpush1.bf16.msra.mxu0 %v84
  %107 = vmatprep.subr.bf16.mxu0 0
  %108 = vmatpush1.bf16.msra.mxu0 %v83
  %109 = vmatprep.subr.bf16.mxu0 0
  %110 = vmatpush1.bf16.msra.mxu0 %v82
  %111 = vmatprep.subr.bf16.mxu0 0
  %112 = vmatpush1.bf16.msra.mxu0 %v81
  %113 = vmatprep.subr.bf16.mxu0 0
  %114 = vmatpush2.bf16.msra.mxu0 0
  %115 = vmatprep.subr.bf16.mxu0 0
  %116 = vmatpush2.bf16.msra.mxu0 0
  %117 = vmatprep.subr.bf16.mxu0 0
  %118 = vmatpush2.bf16.msra.mxu0 0
  %119 = vmatprep.subr.bf16.mxu0 0
  %120 = vmatpush2.bf16.msra.mxu0 0
  %121 = vmatprep.subr.bf16.mxu0 0
  %122 = vmatpush2.bf16.msra.mxu0 0
  %123 = vmatprep.subr.bf16.mxu0 0
  %124 = vmatpush2.bf16.msra.mxu0 0
  %125 = vmatprep.subr.bf16.mxu0 0
  %126 = vmatpush2.bf16.msra.mxu0 0
  %127 = vmatprep.subr.bf16.mxu0 0
  %128 = vmatpush2.bf16.msra.mxu0 0
  %129 = vmatprep.mubr.bf16.mxu0 0
  %130 = vmatmul.mubr.bf16.gmra.mxu0 %v47
  %v131 = vpop.f32.mrf.mxu0
  %v132 = vadd.f32 %v41, %v131
  %v133 = vpop.f32.mrf.mxu0
  %v134 = vpop.f32.mrf.mxu0
  %v135 = vadd.f32 %v41, %v134
  %v136 = vpop.f32.mrf.mxu0
  %137 = vdwg.mxu0
  %v138 = vld [vmem:[%s3] sm:$0xf]
  %v139 = vld [vmem:[%s3 + $0x4] sm:$0xf]
  %v140 = vunpack.c.l.bf16 %v138
  %v141 = vunpack.c.l.bf16 %v139
  %v142 = vadd.f32 %v132, %v140
  %v143 = vadd.f32 %v135, %v141
  %v144 = vpack.c.bf16 %v143, %v142
  %v146 = vunpack.c.l.b16 %v144
  %v147 = vunpack.c.h.b16 %v144
  %v148 = vpack.c.b16 %v146, %v146
  %v149 = vpack.c.b16 %v147, %v147
  %vm152 = vcmask 257024
  %153 = vst.msk [vmem:[%s4] sm:$0xf] %vm152, %v148
  %154 = vst.msk [vmem:[%s4 + $0x4] sm:$0xf] %vm152, %v149
  // Predicated region
  $region18: #{ijepa_linear_probe_forward.22} parent=0 // pred_check
    _
  $region19: #{ijepa_linear_probe_forward.22} parent=0 // pred_check_branch
    %156 = sbr.rel (0) target = $region21
  $region20: #{ijepa_linear_probe_forward.22} parent=0 // pred_region
    _
  $region21: #{ijepa_linear_probe_forward.22} parent=0 // pred_fallthru
    _
  // Predicated region
  $region22: #{ijepa_linear_probe_forward.22} parent=0 // pred_check
    _
  $region23: #{ijepa_linear_probe_forward.22} parent=0 // pred_check_branch
    %158 = sbr.rel (0) target = $region25
  $region24: #{ijepa_linear_probe_forward.22} parent=0 // pred_region
    _
  $region25: #{ijepa_linear_probe_forward.22} parent=0 // pred_fallthru
    _

// kernel: ijepa_linear_probe_forward.21
$region0: #{ijepa_linear_probe_forward.21}
  #allocation0 [shape = 'u32[]', space=smem, size = 0x4, offset = 0x4, fixed_abs, tag = 'smem constant byte address 0x4 - core index']
  #allocation1 [shape = 'u32[144,128]{1,0:T(1,128)}', space=vmem, size = 0x12000, scoped, tag = 'internal scratch']
  %s0 = inlined_call_operand.vmem [shape: bf16[16,32], index: 0, kind: input, shape index: {}]
  %s1 = inlined_call_operand.vmem [shape: bf16[32,128], index: 1, kind: input, shape index: {}]
  %s2 = inlined_call_operand.vmem [shape: f32[1,128], index: 2, kind: input, shape index: {}]
  %s3 = inlined_call_operand.vmem [shape: f32[1,32], index: 3, kind: input, shape index: {}]
  %s4 = inlined_call_operand.vmem [shape: f32[1,32], index: 4, kind: input, shape index: {}]
  %s5 = inlined_call_operand.vmem [shape: bf16[16,128], index: 5, kind: output, shape index: {}]
  %s6 = sld [smem:[#allocation0]]
  $region30: #{ijepa_linear_probe_forward.21} parent=0
    _
  %s8 = ssub.s32 1, %s6
  %s9 = scalar_select 0, %s8, %s6
  // Predicated region
  $region2: #{ijepa_linear_probe_forward.21} parent=0 // pred_check
    _
  $region3: #{ijepa_linear_probe_forward.21} parent=0 // pred_check_branch
    %11 = sbr.rel (0) target = $region5
  $region4: #{ijepa_linear_probe_forward.21} parent=0 // pred_region
    _
  $region5: #{ijepa_linear_probe_forward.21} parent=0 // pred_fallthru
    _
  // Predicated region
  $region6: #{ijepa_linear_probe_forward.21} parent=0 // pred_check
    _
  $region7: #{ijepa_linear_probe_forward.21} parent=0 // pred_check_branch
    %13 = sbr.rel (0) target = $region9
  $region8: #{ijepa_linear_probe_forward.21} parent=0 // pred_region
    _
  $region9: #{ijepa_linear_probe_forward.21} parent=0 // pred_fallthru
    _
  // Predicated region
  $region10: #{ijepa_linear_probe_forward.21} parent=0 // pred_check
    _
  $region11: #{ijepa_linear_probe_forward.21} parent=0 // pred_check_branch
    %15 = sbr.rel (0) target = $region13
  $region12: #{ijepa_linear_probe_forward.21} parent=0 // pred_region
    _
  $region13: #{ijepa_linear_probe_forward.21} parent=0 // pred_fallthru
    _
  // Predicated region
  $region14: #{ijepa_linear_probe_forward.21} parent=0 // pred_check
    _
  $region15: #{ijepa_linear_probe_forward.21} parent=0 // pred_check_branch
    %17 = sbr.rel (0) target = $region17
  $region16: #{ijepa_linear_probe_forward.21} parent=0 // pred_region
    _
  $region17: #{ijepa_linear_probe_forward.21} parent=0 // pred_fallthru
    _
  // Predicated region
  $region18: #{ijepa_linear_probe_forward.21} parent=0 // pred_check
    _
  $region19: #{ijepa_linear_probe_forward.21} parent=0 // pred_check_branch
    %19 = sbr.rel (0) target = $region21
  $region20: #{ijepa_linear_probe_forward.21} parent=0 // pred_region
    _
  $region21: #{ijepa_linear_probe_forward.21} parent=0 // pred_fallthru
    _
  %v21 = vld [vmem:[%s0] sm:$0xf]
  %v22 = vld [vmem:[%s0 + $0x4] sm:$0xf]
  %v23 = vunpack.c.l.bf16 %v21
  %v24 = vunpack.c.l.bf16 %v22
  %vm25 = vcmask 261120
  %v26 = vsel %vm25, %v23, 0.0
  %27 = vadd.xlane.f32.xlu0 %v26
  %v28 = vpop.xlane.xlu0 %27
  %v29 = vsel %vm25, %v24, 0.0
  %30 = vadd.xlane.f32.xlu0 %v29
  %v31 = vpop.xlane.xlu0 %30
  %v32 = vrcp.pop 32.0
  %v33 = vmul.f32 %v28, %v32
  %v34 = vmul.f32 %v31, %v32
  %v35 = vsub.f32 %v23, %v33
  %v36 = vsub.f32 %v24, %v34
  %v37 = vmul.f32 %v35, %v35
  %v38 = vmul.f32 %v36, %v36
  %v39 = vsel %vm25, %v37, 0.0
  %40 = vadd.xlane.f32.xlu0 %v39
  %v41 = vpop.xlane.xlu0 %40
  %v42 = vsel %vm25, %v38, 0.0
  %43 = vadd.xlane.f32.xlu0 %v42
  %v44 = vpop.xlane.xlu0 %43
  %v45 = vmul.f32 %v41, %v32
  %v46 = vmul.f32 %v44, %v32
  %v47 = vadd.f32 %v45, 1e-06
  %v48 = vadd.f32 %v46, 1e-06
  %v49 = vrsqrt.pop %v47
  %v50 = vrsqrt.pop %v48
  %v51 = vmul.f32 %v35, %v49
  %v52 = vmul.f32 %v36, %v50
  %v53 = vld [vmem:[%s3] sm:$0x1]
  %v55 = vlaneseq
  %v56 = vshrl.u32 %v55, 7
  %v57 = vsub.s32 0, %v56
  %v58 = vrot.slane %v53, %v57
  %v60 = vmul.f32 %v51, %v58
  %v61 = vmul.f32 %v52, %v58
  %v62 = vld [vmem:[%s4] sm:$0x1]
  %v64 = vlaneseq
  %v65 = vshrl.u32 %v64, 7
  %v66 = vsub.s32 0, %v65
  %v67 = vrot.slane %v62, %v66
  %v69 = vadd.f32 %v60, %v67
  %v70 = vadd.f32 %v61, %v67
  %v71 = vpack.c.bf16 %v70, %v69
  %v72 = vld [vmem:[%s1] sm:$0xf]
  %v73 = vld [vmem:[%s1 + $0x4] sm:$0xf]
  %v74 = vld [vmem:[%s1 + $0x8] sm:$0xf]
  %v75 = vld [vmem:[%s1 + $0xc] sm:$0xf]
  %v76 = vld [vmem:[%s2] sm:$0x1]
  %v78 = vlaneseq
  %v79 = vshrl.u32 %v78, 7
  %v80 = vsub.s32 0, %v79
  %v81 = vrot.slane %v76, %v80
  %v87 = vunpack.c.l.b16 %v72
  %v88 = vunpack.c.l.b16 %v73
  %v89 = vunpack.c.l.b16 %v74
  %v90 = vunpack.c.l.b16 %v75
  %v91 = vpack.c.b16 %v88, %v87
  %v92 = vpack.c.b16 %v90, %v89
  %v96 = vsel %vm25, %v71, 0
  %98 = vmatprep.subr.bf16.mxu0 0
  %99 = vmatpush1.bf16.msra.mxu0 0
  %100 = vmatprep.subr.bf16.mxu0 0
  %101 = vmatpush1.bf16.msra.mxu0 0
  %102 = vmatprep.subr.bf16.mxu0 0
  %103 = vmatpush1.bf16.msra.mxu0 0
  %104 = vmatprep.subr.bf16.mxu0 0
  %105 = vmatpush1.bf16.msra.mxu0 0
  %106 = vmatprep.subr.bf16.mxu0 0
  %107 = vmatpush1.bf16.msra.mxu0 0
  %108 = vmatprep.subr.bf16.mxu0 0
  %109 = vmatpush1.bf16.msra.mxu0 0
  %110 = vmatprep.subr.bf16.mxu0 0
  %111 = vmatpush1.bf16.msra.mxu0 %v92
  %112 = vmatprep.subr.bf16.mxu0 0
  %113 = vmatpush1.bf16.msra.mxu0 %v91
  %114 = vmatprep.subr.bf16.mxu0 0
  %115 = vmatpush2.bf16.msra.mxu0 0
  %116 = vmatprep.subr.bf16.mxu0 0
  %117 = vmatpush2.bf16.msra.mxu0 0
  %118 = vmatprep.subr.bf16.mxu0 0
  %119 = vmatpush2.bf16.msra.mxu0 0
  %120 = vmatprep.subr.bf16.mxu0 0
  %121 = vmatpush2.bf16.msra.mxu0 0
  %122 = vmatprep.subr.bf16.mxu0 0
  %123 = vmatpush2.bf16.msra.mxu0 0
  %124 = vmatprep.subr.bf16.mxu0 0
  %125 = vmatpush2.bf16.msra.mxu0 0
  %126 = vmatprep.subr.bf16.mxu0 0
  %127 = vmatpush2.bf16.msra.mxu0 0
  %128 = vmatprep.subr.bf16.mxu0 0
  %129 = vmatpush2.bf16.msra.mxu0 0
  %130 = vmatprep.mubr.bf16.mxu0 0
  %131 = vmatmul.mubr.bf16.gmra.mxu0 %v96
  %v132 = vpop.f32.mrf.mxu0
  %v133 = vadd.f32 %v81, %v132
  %v134 = vpop.f32.mrf.mxu0
  %v135 = vpop.f32.mrf.mxu0
  %v136 = vadd.f32 %v81, %v135
  %v137 = vpop.f32.mrf.mxu0
  %138 = vdwg.mxu0
  %v139 = vmul.f32 %v133, %v133
  %v140 = vmul.f32 %v136, %v136
  %v141 = vmul.f32 %v133, %v139
  %v142 = vmul.f32 %v136, %v140
  %v143 = vmul.f32 %v141, 0.044715
  %v144 = vmul.f32 %v142, 0.044715
  %v145 = vadd.f32 %v133, %v143
  %v146 = vadd.f32 %v136, %v144
  %v147 = vmul.f32 %v145, 0.7978846
  %v148 = vmul.f32 %v146, 0.7978846
  %v149 = vtanh.pop %v147
  %v150 = vtanh.pop %v148
  %v151 = vadd.f32 %v149, 1.0
  %v152 = vadd.f32 %v150, 1.0
  %v153 = vmul.f32 %v151, 0.5
  %v154 = vmul.f32 %v152, 0.5
  %v155 = vmul.f32 %v133, %v153
  %v156 = vmul.f32 %v136, %v154
  %v157 = vpack.c.bf16 %v156, %v155
  %v159 = vunpack.c.l.b16 %v157
  %v160 = vunpack.c.h.b16 %v157
  %v161 = vpack.c.b16 %v159, %v159
  %v162 = vpack.c.b16 %v160, %v160
  %165 = vst [vmem:[%s5] sm:$0xf] %v161
  %166 = vst [vmem:[%s5 + $0x4] sm:$0xf] %v162
  // Predicated region
  $region22: #{ijepa_linear_probe_forward.21} parent=0 // pred_check
    _
  $region23: #{ijepa_linear_probe_forward.21} parent=0 // pred_check_branch
    %168 = sbr.rel (0) target = $region25
  $region24: #{ijepa_linear_probe_forward.21} parent=0 // pred_region
    _
  $region25: #{ijepa_linear_probe_forward.21} parent=0 // pred_fallthru
    _
  // Predicated region
  $region26: #{ijepa_linear_probe_forward.21} parent=0 // pred_check
    _
  $region27: #{ijepa_linear_probe_forward.21} parent=0 // pred_check_branch
    %170 = sbr.rel (0) target = $region29
  $region28: #{ijepa_linear_probe_forward.21} parent=0 // pred_region
    _
  $region29: #{ijepa_linear_probe_forward.21} parent=0 // pred_fallthru
    _

// kernel: ijepa_linear_probe_forward.35
$region0: #{ijepa_linear_probe_forward.35}
  #allocation0 [shape = 'u32[]', space=smem, size = 0x4, offset = 0x4, fixed_abs, tag = 'smem constant byte address 0x4 - core index']
  #allocation1 [shape = 'u32[144,128]{1,0:T(1,128)}', space=vmem, size = 0x12000, scoped, tag = 'internal scratch']
  #allocation2 [shape = 'f32[2,128]{1,0:T(2,128)}', space=vmem, size = 0x400, scoped, tag = 'scratch operand']
  %s0 = inlined_call_operand.vmem [shape: bf16[2,8,128], index: 0, kind: input, shape index: {}]
  %s1 = inlined_call_operand.vmem [shape: f32[1,128], index: 1, kind: input, shape index: {}]
  %s2 = inlined_call_operand.vmem [shape: f32[1,128], index: 2, kind: input, shape index: {}]
  %s3 = inlined_call_operand.vmem [shape: bf16[128,128], index: 3, kind: input, shape index: {}]
  %s4 = inlined_call_operand.vmem [shape: f32[1,128], index: 4, kind: input, shape index: {}]
  %s5 = inlined_call_operand.hbm [shape: f32[2,128], index: 5, kind: output, shape index: {}]
  %s6 = sld [smem:[#allocation0]]
  $region38: #{ijepa_linear_probe_forward.35} parent=0
    _
  %s8 = ssub.s32 1, %s6
  %s9 = scalar_select 0, %s8, %s6
  $region1: #{ijepa_linear_probe_forward.35} parent=0
    #allocation3 [shape = 'u8[1024]{0}', space=vmem, size = 0x400, scoped, tag = 'output window, operand 0, single buffered']
    #allocation4 [shape = 's32[1]{0}', space=sflag, size = 0x4, scoped, tag = 'scoped memory for ijepa_linear_probe_forward.35']
    %10 = vsyncpa [#allocation4], 0
    // Predicated region
    $region2: #{ijepa_linear_probe_forward.35} parent=1 // pred_check
      _
    $region3: #{ijepa_linear_probe_forward.35} parent=1 // pred_check_branch
      %12 = sbr.rel (0) target = $region5
    $region4: #{ijepa_linear_probe_forward.35} parent=1 // pred_region
      _
    $region5: #{ijepa_linear_probe_forward.35} parent=1 // pred_fallthru
      _
    // Predicated region
    $region6: #{ijepa_linear_probe_forward.35} parent=1 // pred_check
      _
    $region7: #{ijepa_linear_probe_forward.35} parent=1 // pred_check_branch
      %14 = sbr.rel (0) target = $region9
    $region8: #{ijepa_linear_probe_forward.35} parent=1 // pred_region
      _
    $region9: #{ijepa_linear_probe_forward.35} parent=1 // pred_fallthru
      _
    // Predicated region
    $region10: #{ijepa_linear_probe_forward.35} parent=1 // pred_check
      _
    $region11: #{ijepa_linear_probe_forward.35} parent=1 // pred_check_branch
      %16 = sbr.rel (0) target = $region13
    $region12: #{ijepa_linear_probe_forward.35} parent=1 // pred_region
      _
    $region13: #{ijepa_linear_probe_forward.35} parent=1 // pred_fallthru
      _
    // Predicated region
    $region14: #{ijepa_linear_probe_forward.35} parent=1 // pred_check
      _
    $region15: #{ijepa_linear_probe_forward.35} parent=1 // pred_check_branch
      %18 = sbr.rel (0) target = $region17
    $region16: #{ijepa_linear_probe_forward.35} parent=1 // pred_region
      _
    $region17: #{ijepa_linear_probe_forward.35} parent=1 // pred_fallthru
      _
    // Predicated region
    $region18: #{ijepa_linear_probe_forward.35} parent=1 // pred_check
      _
    $region19: #{ijepa_linear_probe_forward.35} parent=1 // pred_check_branch
      %20 = sbr.rel (0) target = $region21
    $region20: #{ijepa_linear_probe_forward.35} parent=1 // pred_region
      _
    $region21: #{ijepa_linear_probe_forward.35} parent=1 // pred_fallthru
      _
    %p22 = scmp.eq.s32.totalorder 0, 0
    // Predicated region
    $region22: #{ijepa_linear_probe_forward.35} parent=1 // pred_check
      %p23 = pneg %p22
    $region23: #{ijepa_linear_probe_forward.35} parent=1 // pred_check_branch
      %25 = sbr.rel (%p23) target = $region25
    $region24: #{ijepa_linear_probe_forward.35} parent=1 // pred_region
      %26 = vst [vmem:[#allocation2] sm:$0x3] 0.0
    $region25: #{ijepa_linear_probe_forward.35} parent=1 // pred_fallthru
      _
    %v27 = vld [vmem:[#allocation2] sm:$0x3]
    %v28 = vld [vmem:[%s0] sm:$0xf]
    %v29 = vld [vmem:[%s0 + $0x4] sm:$0xf]
    %v30 = vunpack.c.l.bf16 %v28
    %v31 = vunpack.c.l.bf16 %v29
    %v32 = vrot.slane %v30, 4
    %v33 = vadd.f32 %v30, %v32
    %v34 = vrot.slane %v33, 2
    %v35 = vadd.f32 %v33, %v34
    %v36 = vrot.slane %v35, 1
    %v37 = vadd.f32 %v35, %v36
    %v38 = vrot.slane %v31, 4
    %v39 = vadd.f32 %v31, %v38
    %v40 = vrot.slane %v39, 2
    %v41 = vadd.f32 %v39, %v40
    %v42 = vrot.slane %v41, 1
    %v43 = vadd.f32 %v41, %v42
    %vm46 = vcmask 1041409
    %v47 = vsel %vm46, %v43, %v37
    %v49 = vadd.f32 %v27, %v47
    %50 = vst [vmem:[#allocation2] sm:$0x3] %v49
    // Predicated region
    $region26: #{ijepa_linear_probe_forward.35} parent=1 // pred_check
      %p51 = pneg %p22
    $region27: #{ijepa_linear_probe_forward.35} parent=1 // pred_check_branch
      %53 = sbr.rel (%p51) target = $region29
    $region28: #{ijepa_linear_probe_forward.35} parent=1 // pred_region
      %v54 = vld [vmem:[#allocation2] sm:$0x3]
      %v55 = vmul.f32 %v54, 0.25
      %vm56 = vcmask 1041408
      %v57 = vsel %vm56, %v55, 0.0
      %v58 = vrot.slane %v57, 4
      %v59 = vadd.f32 %v57, %v58
      %v60 = vrot.slane %v59, 2
      %v61 = vadd.f32 %v59, %v60
      %v62 = vrot.slane %v61, 1
      %v63 = vadd.f32 %v61, %v62
      %v64 = vrcp.pop 2.0
      %v65 = vmul.f32 %v63, %v64
      %v66 = vsub.f32 %v55, %v65
      %v67 = vmul.f32 %v66, %v66
      %v68 = vsel %vm56, %v67, 0.0
      %v69 = vrot.slane %v68, 4
      %v70 = vadd.f32 %v68, %v69
      %v71 = vrot.slane %v70, 2
      %v72 = vadd.f32 %v70, %v71
      %v73 = vrot.slane %v72, 1
      %v74 = vadd.f32 %v72, %v73
      %v75 = vmul.f32 %v74, %v64
      %v76 = vadd.f32 %v75, 1e-05
      %v77 = vrsqrt.pop %v76
      %v78 = vmul.f32 %v66, %v77
      %v79 = vld [vmem:[%s1] sm:$0x1]
      %v81 = vlaneseq
      %v82 = vshrl.u32 %v81, 7
      %v83 = vsub.s32 0, %v82
      %v84 = vrot.slane %v79, %v83
      %v86 = vmul.f32 %v78, %v84
      %v87 = vld [vmem:[%s2] sm:$0x1]
      %v89 = vlaneseq
      %v90 = vshrl.u32 %v89, 7
      %v91 = vsub.s32 0, %v90
      %v92 = vrot.slane %v87, %v91
      %v94 = vadd.f32 %v86, %v92
      %v95 = vpack.c.bf16 %v94, %v94
      %v96 = vld [vmem:[%s3] sm:$0xf]
      %v97 = vld [vmem:[%s3 + $0x4] sm:$0xf]
      %v98 = vld [vmem:[%s3 + $0x8] sm:$0xf]
      %v99 = vld [vmem:[%s3 + $0xc] sm:$0xf]
      %v100 = vld [vmem:[%s3 + $0x10] sm:$0xf]
      %v101 = vld [vmem:[%s3 + $0x14] sm:$0xf]
      %v102 = vld [vmem:[%s3 + $0x18] sm:$0xf]
      %v103 = vld [vmem:[%s3 + $0x1c] sm:$0xf]
      %v104 = vld [vmem:[%s3 + $0x20] sm:$0xf]
      %v105 = vld [vmem:[%s3 + $0x24] sm:$0xf]
      %v106 = vld [vmem:[%s3 + $0x28] sm:$0xf]
      %v107 = vld [vmem:[%s3 + $0x2c] sm:$0xf]
      %v108 = vld [vmem:[%s3 + $0x30] sm:$0xf]
      %v109 = vld [vmem:[%s3 + $0x34] sm:$0xf]
      %v110 = vld [vmem:[%s3 + $0x38] sm:$0xf]
      %v111 = vld [vmem:[%s3 + $0x3c] sm:$0xf]
      %v112 = vld [vmem:[%s4] sm:$0x1]
      %v114 = vlaneseq
      %v115 = vshrl.u32 %v114, 7
      %v116 = vsub.s32 0, %v115
      %v117 = vrot.slane %v112, %v116
      %v135 = vunpack.c.l.b16 %v96
      %v136 = vunpack.c.l.b16 %v97
      %v137 = vunpack.c.l.b16 %v98
      %v138 = vunpack.c.l.b16 %v99
      %v139 = vunpack.c.l.b16 %v100
      %v140 = vunpack.c.l.b16 %v101
      %v141 = vunpack.c.l.b16 %v102
      %v142 = vunpack.c.l.b16 %v103
      %v143 = vunpack.c.l.b16 %v104
      %v144 = vunpack.c.l.b16 %v105
      %v145 = vunpack.c.l.b16 %v106
      %v146 = vunpack.c.l.b16 %v107
      %v147 = vunpack.c.l.b16 %v108
      %v148 = vunpack.c.l.b16 %v109
      %v149 = vunpack.c.l.b16 %v110
      %v150 = vunpack.c.l.b16 %v111
      %v151 = vpack.c.b16 %v136, %v135
      %v152 = vpack.c.b16 %v138, %v137
      %v153 = vpack.c.b16 %v140, %v139
      %v154 = vpack.c.b16 %v142, %v141
      %v155 = vpack.c.b16 %v144, %v143
      %v156 = vpack.c.b16 %v146, %v145
      %v157 = vpack.c.b16 %v148, %v147
      %v158 = vpack.c.b16 %v150, %v149
      %167 = vmatprep.subr.bf16.mxu0 0
      %168 = vmatpush1.bf16.msra.mxu0 %v158
      %169 = vmatprep.subr.bf16.mxu0 0
      %170 = vmatpush1.bf16.msra.mxu0 %v157
      %171 = vmatprep.subr.bf16.mxu0 0
      %172 = vmatpush1.bf16.msra.mxu0 %v156
      %173 = vmatprep.subr.bf16.mxu0 0
      %174 = vmatpush1.bf16.msra.mxu0 %v155
      %175 = vmatprep.subr.bf16.mxu0 0
      %176 = vmatpush1.bf16.msra.mxu0 %v154
      %177 = vmatprep.subr.bf16.mxu0 0
      %178 = vmatpush1.bf16.msra.mxu0 %v153
      %179 = vmatprep.subr.bf16.mxu0 0
      %180 = vmatpush1.bf16.msra.mxu0 %v152
      %181 = vmatprep.subr.bf16.mxu0 0
      %182 = vmatpush1.bf16.msra.mxu0 %v151
      %183 = vmatprep.subr.bf16.mxu0 0
      %184 = vmatpush2.bf16.msra.mxu0 0
      %185 = vmatprep.subr.bf16.mxu0 0
      %186 = vmatpush2.bf16.msra.mxu0 0
      %187 = vmatprep.subr.bf16.mxu0 0
      %188 = vmatpush2.bf16.msra.mxu0 0
      %189 = vmatprep.subr.bf16.mxu0 0
      %190 = vmatpush2.bf16.msra.mxu0 0
      %191 = vmatprep.subr.bf16.mxu0 0
      %192 = vmatpush2.bf16.msra.mxu0 0
      %193 = vmatprep.subr.bf16.mxu0 0
      %194 = vmatpush2.bf16.msra.mxu0 0
      %195 = vmatprep.subr.bf16.mxu0 0
      %196 = vmatpush2.bf16.msra.mxu0 0
      %197 = vmatprep.subr.bf16.mxu0 0
      %198 = vmatpush2.bf16.msra.mxu0 0
      %199 = vmatprep.mubr.bf16.mxu0 0
      %200 = vmatmul.mubr.bf16.gmra.mxu0 %v95
      %v201 = vpop.f32.mrf.mxu0
      %v202 = vadd.f32 %v117, %v201
      %v203 = vpop.f32.mrf.mxu0
      %v204 = vpop.f32.mrf.mxu0
      %v205 = vpop.f32.mrf.mxu0
      %206 = vdwg.mxu0
      %207 = vst [vmem:[#allocation3] sm:$0x3] %v202
    $region29: #{ijepa_linear_probe_forward.35} parent=1 // pred_fallthru
      _
    // Predicated region
    $region30: #{ijepa_linear_probe_forward.35} parent=1 // pred_check
      _
    $region31: #{ijepa_linear_probe_forward.35} parent=1 // pred_check_branch
      %209 = sbr.rel (0) target = $region33
    $region32: #{ijepa_linear_probe_forward.35} parent=1 // pred_region
      %s211 = ssub.s32 32, 32
      %212 = vsyncadd [#allocation4], %s211
      %s214 = sshll.u32 [#allocation3], 4
      %s215 = int_to_ptr.vmem [resolvable:$true] %s214
      %217 = dma.vmem_to_hbm [thread:$0]  %s215, 32, %s5, [#allocation4]
    $region33: #{ijepa_linear_probe_forward.35} parent=1 // pred_fallthru
      _
    // Predicated region
    $region34: #{ijepa_linear_probe_forward.35} parent=1 // pred_check
      _
    $region35: #{ijepa_linear_probe_forward.35} parent=1 // pred_check_branch
      %219 = sbr.rel (0) target = $region37
    $region36: #{ijepa_linear_probe_forward.35} parent=1 // pred_region
      %220 = dma.done [#allocation4], 32
    $region37: #{ijepa_linear_probe_forward.35} parent=1 // pred_fallthru
      _
    %221 = vsyncpa [#allocation4], 1

</llo_original>
